<compile_context>
chip_gen: v5e
topology: v5e:2x2
jax: 0.10.0
libtpu: 0.0.40
codegen_flags: <defaults>
</compile_context>

<pallas_src>
import functools

import jax
import jax.numpy as jnp
from jax.experimental import pallas as pl
from jax.experimental.pallas import tpu as pltpu


def _round_up(x, m):
    return (x + m - 1) // m * m


def charcnn_kernel(ids_ref, w_ref, mb_ref, y_ref, *, NC, compute_dtype):
    tile_n, Lc = ids_ref.shape
    KNC, C_pad = w_ref.shape          # (Kmax*NC, C_pad) = (256, 128)
    Kmax = KNC // NC
    M = tile_n * Lc

    ids = ids_ref[...]                # (tile_n, Lc) int32

    # --- one-hot im2col from shifted int32 ids ------------------------------
    # Lane j = k*NC + v is hot for row m=(word n, char t) iff ids[n, t+k] == v,
    # i.e. iff (ids rolled by -k along the char axis) + k*NC == j.  The offset
    # ranges [k*NC, (k+1)*NC) are disjoint, so an OR of 4 compares against a
    # single 256-lane iota builds the whole (M, 256) one-hot.  Rows whose
    # window wraps past the end of a word pick up garbage taps but are either
    # killed by zero weight rows (k >= conv width) or masked before the pool.
    lane = jax.lax.broadcasted_iota(jnp.int32, (tile_n, Lc, KNC), 2)
    hit = ids[:, :, None] == lane                          # tap 0: lanes [0, NC)
    for k in range(1, Kmax):
        shifted = jnp.roll(ids, -k, axis=1) + k * NC       # tiny int roll
        hit = jnp.logical_or(hit, shifted[:, :, None] == lane)
    onehot = hit.astype(compute_dtype).reshape(M, KNC)     # exact 0/1 in bf16

    # --- single MXU matmul: fused embedding gather + all three convolutions --
    scores = jnp.dot(onehot, w_ref[...], preferred_element_type=jnp.float32)
    scores = scores.reshape(tile_n, Lc, C_pad)             # (tile_n, Lc, 128) f32

    # --- mask invalid sliding positions (+ per-channel bias), max-pool, ReLU --
    # mb_ref[t, c] = bias[c] at valid positions, -1e30 past the word end.
    pooled = jnp.max(scores + mb_ref[...], axis=1)         # (tile_n, C_pad)
    y_ref[...] = jnp.maximum(pooled, 0.0).astype(y_ref.dtype)


def charcnn_forward(X, emb, W2, b2, W3, b3, W4, b4, *,
                    tile_n=512, compute_dtype=jnp.bfloat16,
                    vmem_limit_bytes=48 * 1024 * 1024):
    """X: (B, Lw, Lc) int32 char ids in [0, N_char).  Returns (B, Lw, 3*Cout) f32."""
    B, Lw, Lc = X.shape
    NC, D = emb.shape
    Cout = W2.shape[2]
    C = 3 * Cout
    C_pad = _round_up(C, 128)          # lane-dense output slab
    Kmax = 4
    KNC = Kmax * NC
    assert Lc >= Kmax, "conv14 needs at least 4 chars per word"

    # TODO(synk): nn.Dropout(nn_dropout) — inference mode assumed (identity).

    N = B * Lw
    ids = X.reshape(N, Lc).astype(jnp.int32)
    tile = _round_up(min(tile_n, N), 8)
    N_pad = _round_up(N, tile)
    if N_pad != N:
        ids = jnp.pad(ids, ((0, N_pad - N), (0, 0)))   # padded words sliced off below

    # Fold the embedding into the conv weights: E_{g,k} = emb @ W_g[k]  (NC, Cout).
    # Rows k*NC:(k+1)*NC, cols g*Cout:(g+1)*Cout of the packed weight hold E_{g,k};
    # unused taps (k >= conv width) and pad lanes stay zero.
    Wp = jnp.zeros((KNC, C_pad), jnp.float32)
    for g, W in enumerate((W2, W3, W4)):
        K = W.shape[0]
        E = jnp.einsum("vd,kdc->kvc", emb.astype(jnp.float32),
                       W.astype(jnp.float32),
                       precision=jax.lax.Precision.HIGHEST)   # (K, NC, Cout)
        for k in range(K):
            Wp = Wp.at[k * NC:(k + 1) * NC, g * Cout:(g + 1) * Cout].set(E[k])
    Wp_c = Wp.astype(compute_dtype)

    # Combined bias + position mask: bias at valid sliding positions, -1e30 past
    # the end of the word (per conv width).  Pad lanes stay -1e30 -> ReLU -> 0.
    mb = jnp.full((Lc, C_pad), -1e30, jnp.float32)
    for g, (K, b) in enumerate(zip((2, 3, 4), (b2, b3, b4))):
        valid = Lc - K + 1
        mb = mb.at[:valid, g * Cout:(g + 1) * Cout].set(
            jnp.broadcast_to(b.astype(jnp.float32)[None, :], (valid, Cout)))

    grid = (N_pad // tile,)
    kernel = functools.partial(charcnn_kernel, NC=NC, compute_dtype=compute_dtype)

    cost = pl.CostEstimate(
        flops=2 * N_pad * Lc * KNC * C_pad,
        transcendentals=0,
        bytes_accessed=(ids.size * 4 + Wp_c.size * Wp_c.dtype.itemsize
                        + mb.size * 4 + N_pad * C_pad * 4),
    )

    y = pl.pallas_call(
        kernel,
        out_shape=jax.ShapeDtypeStruct((N_pad, C_pad), jnp.float32),
        grid_spec=pltpu.PrefetchScalarGridSpec(
            num_scalar_prefetch=0,
            grid=grid,
            in_specs=[
                pl.BlockSpec((tile, Lc), lambda i: (i, 0)),     # char ids (tiled)
                pl.BlockSpec((KNC, C_pad), lambda i: (0, 0)),   # fused emb+conv weights
                pl.BlockSpec((Lc, C_pad), lambda i: (0, 0)),    # bias + position mask
            ],
            out_specs=pl.BlockSpec((tile, C_pad), lambda i: (i, 0)),
        ),
        compiler_params=pltpu.CompilerParams(
            dimension_semantics=("parallel",),
            vmem_limit_bytes=vmem_limit_bytes),
        cost_estimate=cost,
    )(ids, Wp_c, mb)

    # NOTE: consumers that accept a lane-padded (N, 128) slab should use y[:N]
    # directly — this slice re-reads/re-writes the output once in XLA.
    return y[:N, :C].reshape(B, Lw, C)


def ref_forward(X, emb, W2, b2, W3, b3, W4, b4):
    """Pure-JAX reference mirroring the PyTorch forward (eval mode)."""
    B, Lw, Lc = X.shape
    x = emb[X.reshape(B * Lw, Lc)]                  # (N, Lc, D)

    def conv_pool(W, b):
        K = W.shape[0]
        valid = Lc - K + 1
        scores = sum(
            jnp.einsum("nld,dc->nlc", x[:, k:k + valid, :], W[k],
                       precision=jax.lax.Precision.HIGHEST)
            for k in range(K)
        ) + b.reshape(1, 1, -1)
        return jnp.max(jax.nn.relu(scores), axis=1)

    out = jnp.concatenate(
        [conv_pool(W2, b2), conv_pool(W3, b3), conv_pool(W4, b4)], axis=-1)
    return out.reshape(B, Lw, -1)


if __name__ == "__main__":
    # Hyperparameters implied by the module.
    N_char = 64          # params.N_char
    dim_char = 32        # params.dim_char
    n_char_filters = 96  # params.n_char_filters
    Cout = n_char_filters // 3

    B, Lw, Lc = 2, 8, 16

    key = jax.random.PRNGKey(0)
    k_emb, k_x, k_x2, kw2, kb2, kw3, kb3, kw4, kb4 = jax.random.split(key, 9)

    # random_embedding: U(-sqrt(3/D), sqrt(3/D))
    scale = jnp.sqrt(3.0 / dim_char)
    emb = jax.random.uniform(k_emb, (N_char, dim_char), jnp.float32,
                             minval=-scale, maxval=scale)

    # Conv weights, stored as (K, D, Cout) == PyTorch (Cout, 1, K, D) transposed.
    def conv_init(k, K):
        bound = 1.0 / jnp.sqrt(1 * K * dim_char)
        return jax.random.uniform(k, (K, dim_char, Cout), jnp.float32,
                                  minval=-bound, maxval=bound)

    W2, W3, W4 = conv_init(kw2, 2), conv_init(kw3, 3), conv_init(kw4, 4)
    b2 = jax.random.uniform(kb2, (Cout,), jnp.float32, minval=-0.1, maxval=0.1)
    b3 = jax.random.uniform(kb3, (Cout,), jnp.float32, minval=-0.1, maxval=0.1)
    b4 = jax.random.uniform(kb4, (Cout,), jnp.float32, minval=-0.1, maxval=0.1)

    X = jax.random.randint(k_x, (B, Lw, Lc), 0, N_char, dtype=jnp.int32)
    y_ref = ref_forward(X, emb, W2, b2, W3, b3, W4, b4)

    # Default path: bf16 MXU inputs with f32 accumulation (rounds emb@W only).
    y = jax.block_until_ready(charcnn_forward(X, emb, W2, b2, W3, b3, W4, b4))
    assert y.shape == (B, Lw, 3 * Cout)
    assert jnp.allclose(y, y_ref, atol=3e-2, rtol=3e-2), \
        float(jnp.max(jnp.abs(y - y_ref)))

    # f32 compute path: exact gather/sum, tight tolerance.
    y32 = jax.block_until_ready(
        charcnn_forward(X, emb, W2, b2, W3, b3, W4, b4,
                        compute_dtype=jnp.float32))
    assert jnp.allclose(y32, y_ref, atol=1e-5, rtol=1e-5), \
        float(jnp.max(jnp.abs(y32 - y_ref)))

    # Padded-N / multi-step-grid path (N = 200 -> padded to 256, grid of 4).
    B2, Lw2 = 4, 50
    X2 = jax.random.randint(k_x2, (B2, Lw2, Lc), 0, N_char, dtype=jnp.int32)
    y2 = jax.block_until_ready(
        charcnn_forward(X2, emb, W2, b2, W3, b3, W4, b4, tile_n=64))
    y2_ref = ref_forward(X2, emb, W2, b2, W3, b3, W4, b4)
    assert jnp.allclose(y2, y2_ref, atol=3e-2, rtol=3e-2), \
        float(jnp.max(jnp.abs(y2 - y2_ref)))

    print("KERNEL_OK")
</pallas_src>

<mosaic_0001>
module attributes {stable_mosaic.version = 11 : i64} {
  func.func @charcnn_kernel(%arg0: i32, %arg1: memref<16x16xi32, #tpu.memory_space<vmem>>, %arg2: memref<256x128xbf16, #tpu.memory_space<vmem>>, %arg3: memref<16x128xf32, #tpu.memory_space<vmem>>, %arg4: memref<16x128xf32, #tpu.memory_space<vmem>>) attributes {dimension_semantics = [#tpu.dimension_semantics<parallel>], iteration_bounds = array<i64: 1>, scalar_prefetch = 0 : i64, scratch_operands = 0 : i64, tpu.core_type = #tpu.core_type<tc>, window_params = [{transform_indices = @transform_0, window_bounds = array<i64: 16, 16>}, {pipeline_mode = #tpu.pipeline_mode<synchronous>, transform_indices = @transform_1, window_bounds = array<i64: 256, 128>}, {pipeline_mode = #tpu.pipeline_mode<synchronous>, transform_indices = @transform_2, window_bounds = array<i64: 16, 128>}, {transform_indices = @transform_3, window_bounds = array<i64: 16, 128>}]} {
    %c0 = arith.constant 0 : index
    %c0_0 = arith.constant 0 : index
    %0 = vector.load %arg1[%c0, %c0_0] : memref<16x16xi32, #tpu.memory_space<vmem>>, vector<16x16xi32>
    %1 = tpu.iota {dimensions = array<i32: 2>} : vector<16x16x256xi32>
    %2 = vector.shape_cast %0 : vector<16x16xi32> to vector<16x16x1xi32>
    %3 = vector.broadcast %2 : vector<16x16x1xi32> to vector<16x16x256xi32>
    %4 = arith.cmpi eq, %3, %1 : vector<16x16x256xi32>
    %5 = vector.extract_strided_slice %0 {offsets = [0, 1], sizes = [16, 15], strides = [1, 1]} : vector<16x16xi32> to vector<16x15xi32>
    %6 = vector.extract_strided_slice %0 {offsets = [0, 0], sizes = [16, 1], strides = [1, 1]} : vector<16x16xi32> to vector<16x1xi32>
    %7 = tpu.concatenate %5, %6 in 1 : vector<16x15xi32>, vector<16x1xi32> -> vector<16x16xi32>
    %c64_i32 = arith.constant 64 : i32
    %8 = vector.broadcast %c64_i32 : i32 to vector<16x16xi32>
    %9 = arith.addi %7, %8 : vector<16x16xi32>
    %10 = vector.shape_cast %9 : vector<16x16xi32> to vector<16x16x1xi32>
    %11 = vector.broadcast %10 : vector<16x16x1xi32> to vector<16x16x256xi32>
    %12 = arith.cmpi eq, %11, %1 : vector<16x16x256xi32>
    %13 = arith.ori %4, %12 : vector<16x16x256xi1>
    %14 = vector.extract_strided_slice %0 {offsets = [0, 2], sizes = [16, 14], strides = [1, 1]} : vector<16x16xi32> to vector<16x14xi32>
    %15 = vector.extract_strided_slice %0 {offsets = [0, 0], sizes = [16, 2], strides = [1, 1]} : vector<16x16xi32> to vector<16x2xi32>
    %16 = tpu.concatenate %14, %15 in 1 : vector<16x14xi32>, vector<16x2xi32> -> vector<16x16xi32>
    %c128_i32 = arith.constant 128 : i32
    %17 = vector.broadcast %c128_i32 : i32 to vector<16x16xi32>
    %18 = arith.addi %16, %17 : vector<16x16xi32>
    %19 = vector.shape_cast %18 : vector<16x16xi32> to vector<16x16x1xi32>
    %20 = vector.broadcast %19 : vector<16x16x1xi32> to vector<16x16x256xi32>
    %21 = arith.cmpi eq, %20, %1 : vector<16x16x256xi32>
    %22 = arith.ori %13, %21 : vector<16x16x256xi1>
    %23 = vector.extract_strided_slice %0 {offsets = [0, 3], sizes = [16, 13], strides = [1, 1]} : vector<16x16xi32> to vector<16x13xi32>
    %24 = vector.extract_strided_slice %0 {offsets = [0, 0], sizes = [16, 3], strides = [1, 1]} : vector<16x16xi32> to vector<16x3xi32>
    %25 = tpu.concatenate %23, %24 in 1 : vector<16x13xi32>, vector<16x3xi32> -> vector<16x16xi32>
    %c192_i32 = arith.constant 192 : i32
    %26 = vector.broadcast %c192_i32 : i32 to vector<16x16xi32>
    %27 = arith.addi %25, %26 : vector<16x16xi32>
    %28 = vector.shape_cast %27 : vector<16x16xi32> to vector<16x16x1xi32>
    %29 = vector.broadcast %28 : vector<16x16x1xi32> to vector<16x16x256xi32>
    %30 = arith.cmpi eq, %29, %1 : vector<16x16x256xi32>
    %31 = arith.ori %22, %30 : vector<16x16x256xi1>
    %32 = arith.extui %31 : vector<16x16x256xi1> to vector<16x16x256xi32>
    %33 = arith.sitofp %32 : vector<16x16x256xi32> to vector<16x16x256xf32>
    %34 = arith.truncf %33 : vector<16x16x256xf32> to vector<16x16x256xbf16>
    %35 = vector.shape_cast %34 : vector<16x16x256xbf16> to vector<256x256xbf16>
    %c0_1 = arith.constant 0 : index
    %c0_2 = arith.constant 0 : index
    %36 = vector.load %arg2[%c0_1, %c0_2] : memref<256x128xbf16, #tpu.memory_space<vmem>>, vector<256x128xbf16>
    %cst = arith.constant dense<0.000000e+00> : vector<256x128xf32>
    %37 = tpu.matmul %35, %36, %cst {dimension_numbers = #tpu.dot_dimension_numbers<[1], [0], [0], [1], [0, 0, 1, 1], [], []>} : vector<256x256xbf16>, vector<256x128xbf16>, vector<256x128xf32> -> vector<256x128xf32>
    %38 = vector.shape_cast %37 : vector<256x128xf32> to vector<16x16x128xf32>
    %c0_3 = arith.constant 0 : index
    %c0_4 = arith.constant 0 : index
    %39 = vector.load %arg3[%c0_3, %c0_4] : memref<16x128xf32, #tpu.memory_space<vmem>>, vector<16x128xf32>
    %40 = vector.shape_cast %39 : vector<16x128xf32> to vector<1x16x128xf32>
    %41 = vector.broadcast %40 : vector<1x16x128xf32> to vector<16x16x128xf32>
    %42 = arith.addf %38, %41 : vector<16x16x128xf32>
    %cst_5 = arith.constant dense<0xFF800000> : vector<16x128xf32>
    %43 = vector.multi_reduction <maximumf>, %42, %cst_5 [1] : vector<16x16x128xf32> to vector<16x128xf32>
    %cst_6 = arith.constant 0.000000e+00 : f32
    %44 = vector.broadcast %cst_6 : f32 to vector<16x128xf32>
    %45 = arith.maximumf %43, %44 : vector<16x128xf32>
    %c0_7 = arith.constant 0 : index
    %c0_8 = arith.constant 0 : index
    %46 = vector.load %arg4[%c0_7, %c0_8] : memref<16x128xf32, #tpu.memory_space<vmem>>, vector<16x128xf32>
    tpu.vector_store %arg4[%c0_7, %c0_8], %45 {strides = array<i32>} : memref<16x128xf32, #tpu.memory_space<vmem>>, vector<16x128xf32>,
    return
  }
  func.func @transform_0(%arg0: i32) -> (i32, i32) {
    %c0_i32 = arith.constant 0 : i32
    %c0_i32_0 = arith.constant 0 : i32
    return %arg0, %c0_i32 : i32, i32
  }
  func.func @transform_1(%arg0: i32) -> (i32, i32) {
    %c0_i32 = arith.constant 0 : i32
    %c0_i32_0 = arith.constant 0 : i32
    %c0_i32_1 = arith.constant 0 : i32
    return %c0_i32, %c0_i32_0 : i32, i32
  }
  func.func @transform_2(%arg0: i32) -> (i32, i32) {
    %c0_i32 = arith.constant 0 : i32
    %c0_i32_0 = arith.constant 0 : i32
    %c0_i32_1 = arith.constant 0 : i32
    return %c0_i32, %c0_i32_0 : i32, i32
  }
  func.func @transform_3(%arg0: i32) -> (i32, i32) {
    %c0_i32 = arith.constant 0 : i32
    %c0_i32_0 = arith.constant 0 : i32
    return %arg0, %c0_i32 : i32, i32
  }
}

</mosaic_0001>

<llo_original>
// kernel: tpu_custom_call.1
$region0: #{tpu_custom_call.1}
  #allocation0 [shape = 'u32[]', space=smem, size = 0x4, offset = 0x4, fixed_abs, tag = 'smem constant byte address 0x4 - core index']
  #allocation1 [shape = 'u32[72,128]{1,0:T(1,128)}', space=vmem, size = 0x9000, scoped, tag = 'internal scratch']
  %s0 = inlined_call_operand.hbm [shape: s32[16,16], index: 0, kind: input, shape index: {}]
  %s1 = inlined_call_operand.hbm [shape: bf16[256,128], index: 1, kind: input, shape index: {}]
  %s2 = inlined_call_operand.hbm [shape: f32[16,128], index: 2, kind: input, shape index: {}]
  %s3 = inlined_call_operand.hbm [shape: f32[16,128], index: 3, kind: output, shape index: {}]
  %s4 = sld [smem:[#allocation0]]
  $region34: #{tpu_custom_call.1} parent=0
    _
  %s6 = ssub.s32 1, %s4
  %s7 = scalar_select 0, %s6, %s4
  $region1: #{tpu_custom_call.1} parent=0
    #allocation2 [shape = 'u8[8192]{0}', space=vmem, size = 0x2000, scoped, tag = 'input window, operand 0, single buffered']
    #allocation3 [shape = 's32[1]{0}', space=sflag, size = 0x4, scoped, tag = 'scoped memory for tpu_custom_call.1']
    #allocation4 [shape = 's32[1]{0}', space=sflag, size = 0x4, scoped, tag = 'scoped memory for tpu_custom_call.1']
    #allocation5 [shape = 'u8[65536]{0}', space=vmem, size = 0x10000, scoped, tag = 'input window, operand 1, single buffered']
    #allocation6 [shape = 's32[1]{0}', space=sflag, size = 0x4, scoped, tag = 'scoped memory for tpu_custom_call.1']
    #allocation7 [shape = 'u8[8192]{0}', space=vmem, size = 0x2000, scoped, tag = 'input window, operand 2, single buffered']
    #allocation8 [shape = 'u8[8192]{0}', space=vmem, size = 0x2000, scoped, tag = 'output window, operand 0, single buffered']
    %8 = vsyncpa [#allocation3], 0
    %9 = vsyncpa [#allocation6], 0
    %10 = vsyncpa [#allocation4], 0
    // Predicated region
    $region2: #{tpu_custom_call.1} parent=1 // pred_check
      _
    $region3: #{tpu_custom_call.1} parent=1 // pred_check_branch
      %12 = sbr.rel (0) target = $region5
    $region4: #{tpu_custom_call.1} parent=1 // pred_region
      %14 = vsyncadd [#allocation3], 0
      %s15 = sshll.u32 %s0, 4
      %s16 = int_to_ptr.hbm [resolvable:$true] %s15
      %s17 = sshll.u32 [#allocation2], 4
      %s18 = int_to_ptr.vmem [resolvable:$true] %s17
      %23 = dma.hbm_to_vmem [thread:$0]  %s16, 256, %s18, [#allocation3], 128, 128, 8
    $region5: #{tpu_custom_call.1} parent=1 // pred_fallthru
      _
    // Predicated region
    $region6: #{tpu_custom_call.1} parent=1 // pred_check
      _
    $region7: #{tpu_custom_call.1} parent=1 // pred_check_branch
      %25 = sbr.rel (0) target = $region9
    $region8: #{tpu_custom_call.1} parent=1 // pred_region
      %27 = vsyncadd [#allocation6], 0
      %s28 = sshll.u32 %s1, 4
      %s29 = int_to_ptr.hbm [resolvable:$true] %s28
      %s30 = sshll.u32 [#allocation5], 4
      %s31 = int_to_ptr.vmem [resolvable:$true] %s30
      %36 = dma.hbm_to_vmem [thread:$0]  %s29, 2048, %s31, [#allocation6], 64, 64, 4
    $region9: #{tpu_custom_call.1} parent=1 // pred_fallthru
      _
    // Predicated region
    $region10: #{tpu_custom_call.1} parent=1 // pred_check
      _
    $region11: #{tpu_custom_call.1} parent=1 // pred_check_branch
      %38 = sbr.rel (0) target = $region13
    $region12: #{tpu_custom_call.1} parent=1 // pred_region
      %40 = vsyncadd [#allocation6], 0
      %s41 = sshll.u32 %s2, 4
      %s42 = int_to_ptr.hbm [resolvable:$true] %s41
      %s43 = sshll.u32 [#allocation7], 4
      %s44 = int_to_ptr.vmem [resolvable:$true] %s43
      %49 = dma.hbm_to_vmem [thread:$0]  %s42, 256, %s44, [#allocation6], 128, 128, 8
    $region13: #{tpu_custom_call.1} parent=1 // pred_fallthru
      _
    // Predicated region
    $region14: #{tpu_custom_call.1} parent=1 // pred_check
      _
    $region15: #{tpu_custom_call.1} parent=1 // pred_check_branch
      %51 = sbr.rel (0) target = $region17
    $region16: #{tpu_custom_call.1} parent=1 // pred_region
      %53 = dma.done [#allocation3], 256
    $region17: #{tpu_custom_call.1} parent=1 // pred_fallthru
      _
    // Predicated region
    $region18: #{tpu_custom_call.1} parent=1 // pred_check
      _
    $region19: #{tpu_custom_call.1} parent=1 // pred_check_branch
      %55 = sbr.rel (0) target = $region21
    $region20: #{tpu_custom_call.1} parent=1 // pred_region
      %57 = dma.done [#allocation6], 2048
    $region21: #{tpu_custom_call.1} parent=1 // pred_fallthru
      _
    // Predicated region
    $region22: #{tpu_custom_call.1} parent=1 // pred_check
      _
    $region23: #{tpu_custom_call.1} parent=1 // pred_check_branch
      %59 = sbr.rel (0) target = $region25
    $region24: #{tpu_custom_call.1} parent=1 // pred_region
      %61 = dma.done [#allocation6], 256
    $region25: #{tpu_custom_call.1} parent=1 // pred_fallthru
      _
    %v62 = vld [vmem:[#allocation2] sm:$0xff]
    %v63 = vld [vmem:[#allocation2 + $0x8] sm:$0xff]
    %v64 = vlaneseq
    %v65 = vand.u32 %v64, 127
    %v66 = vadd.s32 %v65, 128
    %v67 = vperm.slane %v62, 0
    %v68 = vlaneseq
    %v69 = vshrl.u32 %v68, 7
    %71 = vset.pattern.permute.xlu0 %v69
    %72 = vperm.xlu0 %71, %v67
    %v73 = vpop.permute.xlu0 %72
    %v74 = vlaneseq
    %v75 = vshrl.u32 %v74, 7
    %v76 = vadd.s32 %v75, 8
    %77 = vset.pattern.permute.xlu0 %v76
    %78 = vperm.xlu0 %77, %v67
    %v79 = vpop.permute.xlu0 %78
    %v80 = vperm.slane %v62, 1
    %v81 = vlaneseq
    %v82 = vshrl.u32 %v81, 7
    %84 = vset.pattern.permute.xlu0 %v82
    %85 = vperm.xlu0 %84, %v80
    %v86 = vpop.permute.xlu0 %85
    %v87 = vlaneseq
    %v88 = vshrl.u32 %v87, 7
    %v89 = vadd.s32 %v88, 8
    %90 = vset.pattern.permute.xlu0 %v89
    %91 = vperm.xlu0 %90, %v80
    %v92 = vpop.permute.xlu0 %91
    %v93 = vperm.slane %v62, 2
    %v94 = vlaneseq
    %v95 = vshrl.u32 %v94, 7
    %97 = vset.pattern.permute.xlu0 %v95
    %98 = vperm.xlu0 %97, %v93
    %v99 = vpop.permute.xlu0 %98
    %v100 = vlaneseq
    %v101 = vshrl.u32 %v100, 7
    %v102 = vadd.s32 %v101, 8
    %103 = vset.pattern.permute.xlu0 %v102
    %104 = vperm.xlu0 %103, %v93
    %v105 = vpop.permute.xlu0 %104
    %v106 = vperm.slane %v62, 3
    %v107 = vlaneseq
    %v108 = vshrl.u32 %v107, 7
    %110 = vset.pattern.permute.xlu0 %v108
    %111 = vperm.xlu0 %110, %v106
    %v112 = vpop.permute.xlu0 %111
    %v113 = vlaneseq
    %v114 = vshrl.u32 %v113, 7
    %v115 = vadd.s32 %v114, 8
    %116 = vset.pattern.permute.xlu0 %v115
    %117 = vperm.xlu0 %116, %v106
    %v118 = vpop.permute.xlu0 %117
    %v119 = vperm.slane %v62, 4
    %v120 = vlaneseq
    %v121 = vshrl.u32 %v120, 7
    %123 = vset.pattern.permute.xlu0 %v121
    %124 = vperm.xlu0 %123, %v119
    %v125 = vpop.permute.xlu0 %124
    %v126 = vlaneseq
    %v127 = vshrl.u32 %v126, 7
    %v128 = vadd.s32 %v127, 8
    %129 = vset.pattern.permute.xlu0 %v128
    %130 = vperm.xlu0 %129, %v119
    %v131 = vpop.permute.xlu0 %130
    %v132 = vperm.slane %v62, 5
    %v133 = vlaneseq
    %v134 = vshrl.u32 %v133, 7
    %136 = vset.pattern.permute.xlu0 %v134
    %137 = vperm.xlu0 %136, %v132
    %v138 = vpop.permute.xlu0 %137
    %v139 = vlaneseq
    %v140 = vshrl.u32 %v139, 7
    %v141 = vadd.s32 %v140, 8
    %142 = vset.pattern.permute.xlu0 %v141
    %143 = vperm.xlu0 %142, %v132
    %v144 = vpop.permute.xlu0 %143
    %v145 = vperm.slane %v62, 6
    %v146 = vlaneseq
    %v147 = vshrl.u32 %v146, 7
    %149 = vset.pattern.permute.xlu0 %v147
    %150 = vperm.xlu0 %149, %v145
    %v151 = vpop.permute.xlu0 %150
    %v152 = vlaneseq
    %v153 = vshrl.u32 %v152, 7
    %v154 = vadd.s32 %v153, 8
    %155 = vset.pattern.permute.xlu0 %v154
    %156 = vperm.xlu0 %155, %v145
    %v157 = vpop.permute.xlu0 %156
    %v158 = vperm.slane %v62, 7
    %v159 = vlaneseq
    %v160 = vshrl.u32 %v159, 7
    %162 = vset.pattern.permute.xlu0 %v160
    %163 = vperm.xlu0 %162, %v158
    %v164 = vpop.permute.xlu0 %163
    %v165 = vlaneseq
    %v166 = vshrl.u32 %v165, 7
    %v167 = vadd.s32 %v166, 8
    %168 = vset.pattern.permute.xlu0 %v167
    %169 = vperm.xlu0 %168, %v158
    %v170 = vpop.permute.xlu0 %169
    %v171 = vperm.slane %v63, 0
    %v172 = vlaneseq
    %v173 = vshrl.u32 %v172, 7
    %175 = vset.pattern.permute.xlu0 %v173
    %176 = vperm.xlu0 %175, %v171
    %v177 = vpop.permute.xlu0 %176
    %v178 = vlaneseq
    %v179 = vshrl.u32 %v178, 7
    %v180 = vadd.s32 %v179, 8
    %181 = vset.pattern.permute.xlu0 %v180
    %182 = vperm.xlu0 %181, %v171
    %v183 = vpop.permute.xlu0 %182
    %v184 = vperm.slane %v63, 1
    %v185 = vlaneseq
    %v186 = vshrl.u32 %v185, 7
    %188 = vset.pattern.permute.xlu0 %v186
    %189 = vperm.xlu0 %188, %v184
    %v190 = vpop.permute.xlu0 %189
    %v191 = vlaneseq
    %v192 = vshrl.u32 %v191, 7
    %v193 = vadd.s32 %v192, 8
    %194 = vset.pattern.permute.xlu0 %v193
    %195 = vperm.xlu0 %194, %v184
    %v196 = vpop.permute.xlu0 %195
    %v197 = vperm.slane %v63, 2
    %v198 = vlaneseq
    %v199 = vshrl.u32 %v198, 7
    %201 = vset.pattern.permute.xlu0 %v199
    %202 = vperm.xlu0 %201, %v197
    %v203 = vpop.permute.xlu0 %202
    %v204 = vlaneseq
    %v205 = vshrl.u32 %v204, 7
    %v206 = vadd.s32 %v205, 8
    %207 = vset.pattern.permute.xlu0 %v206
    %208 = vperm.xlu0 %207, %v197
    %v209 = vpop.permute.xlu0 %208
    %v210 = vperm.slane %v63, 3
    %v211 = vlaneseq
    %v212 = vshrl.u32 %v211, 7
    %214 = vset.pattern.permute.xlu0 %v212
    %215 = vperm.xlu0 %214, %v210
    %v216 = vpop.permute.xlu0 %215
    %v217 = vlaneseq
    %v218 = vshrl.u32 %v217, 7
    %v219 = vadd.s32 %v218, 8
    %220 = vset.pattern.permute.xlu0 %v219
    %221 = vperm.xlu0 %220, %v210
    %v222 = vpop.permute.xlu0 %221
    %v223 = vperm.slane %v63, 4
    %v224 = vlaneseq
    %v225 = vshrl.u32 %v224, 7
    %227 = vset.pattern.permute.xlu0 %v225
    %228 = vperm.xlu0 %227, %v223
    %v229 = vpop.permute.xlu0 %228
    %v230 = vlaneseq
    %v231 = vshrl.u32 %v230, 7
    %v232 = vadd.s32 %v231, 8
    %233 = vset.pattern.permute.xlu0 %v232
    %234 = vperm.xlu0 %233, %v223
    %v235 = vpop.permute.xlu0 %234
    %v236 = vperm.slane %v63, 5
    %v237 = vlaneseq
    %v238 = vshrl.u32 %v237, 7
    %240 = vset.pattern.permute.xlu0 %v238
    %241 = vperm.xlu0 %240, %v236
    %v242 = vpop.permute.xlu0 %241
    %v243 = vlaneseq
    %v244 = vshrl.u32 %v243, 7
    %v245 = vadd.s32 %v244, 8
    %246 = vset.pattern.permute.xlu0 %v245
    %247 = vperm.xlu0 %246, %v236
    %v248 = vpop.permute.xlu0 %247
    %v249 = vperm.slane %v63, 6
    %v250 = vlaneseq
    %v251 = vshrl.u32 %v250, 7
    %253 = vset.pattern.permute.xlu0 %v251
    %254 = vperm.xlu0 %253, %v249
    %v255 = vpop.permute.xlu0 %254
    %v256 = vlaneseq
    %v257 = vshrl.u32 %v256, 7
    %v258 = vadd.s32 %v257, 8
    %259 = vset.pattern.permute.xlu0 %v258
    %260 = vperm.xlu0 %259, %v249
    %v261 = vpop.permute.xlu0 %260
    %v262 = vperm.slane %v63, 7
    %v263 = vlaneseq
    %v264 = vshrl.u32 %v263, 7
    %266 = vset.pattern.permute.xlu0 %v264
    %267 = vperm.xlu0 %266, %v262
    %v268 = vpop.permute.xlu0 %267
    %v269 = vlaneseq
    %v270 = vshrl.u32 %v269, 7
    %v271 = vadd.s32 %v270, 8
    %272 = vset.pattern.permute.xlu0 %v271
    %273 = vperm.xlu0 %272, %v262
    %v274 = vpop.permute.xlu0 %273
    %vm275 = vcmp.eq.s32.totalorder %v73, %v65
    %vm276 = vcmp.eq.s32.totalorder %v73, %v66
    %vm277 = vcmp.eq.s32.totalorder %v79, %v65
    %vm278 = vcmp.eq.s32.totalorder %v79, %v66
    %vm279 = vcmp.eq.s32.totalorder %v86, %v65
    %vm280 = vcmp.eq.s32.totalorder %v86, %v66
    %vm281 = vcmp.eq.s32.totalorder %v92, %v65
    %vm282 = vcmp.eq.s32.totalorder %v92, %v66
    %vm283 = vcmp.eq.s32.totalorder %v99, %v65
    %vm284 = vcmp.eq.s32.totalorder %v99, %v66
    %vm285 = vcmp.eq.s32.totalorder %v105, %v65
    %vm286 = vcmp.eq.s32.totalorder %v105, %v66
    %vm287 = vcmp.eq.s32.totalorder %v112, %v65
    %vm288 = vcmp.eq.s32.totalorder %v112, %v66
    %vm289 = vcmp.eq.s32.totalorder %v118, %v65
    %vm290 = vcmp.eq.s32.totalorder %v118, %v66
    %vm291 = vcmp.eq.s32.totalorder %v125, %v65
    %vm292 = vcmp.eq.s32.totalorder %v125, %v66
    %vm293 = vcmp.eq.s32.totalorder %v131, %v65
    %vm294 = vcmp.eq.s32.totalorder %v131, %v66
    %vm295 = vcmp.eq.s32.totalorder %v138, %v65
    %vm296 = vcmp.eq.s32.totalorder %v138, %v66
    %vm297 = vcmp.eq.s32.totalorder %v144, %v65
    %vm298 = vcmp.eq.s32.totalorder %v144, %v66
    %vm299 = vcmp.eq.s32.totalorder %v151, %v65
    %vm300 = vcmp.eq.s32.totalorder %v151, %v66
    %vm301 = vcmp.eq.s32.totalorder %v157, %v65
    %vm302 = vcmp.eq.s32.totalorder %v157, %v66
    %vm303 = vcmp.eq.s32.totalorder %v164, %v65
    %vm304 = vcmp.eq.s32.totalorder %v164, %v66
    %vm305 = vcmp.eq.s32.totalorder %v170, %v65
    %vm306 = vcmp.eq.s32.totalorder %v170, %v66
    %vm307 = vcmp.eq.s32.totalorder %v177, %v65
    %vm308 = vcmp.eq.s32.totalorder %v177, %v66
    %vm309 = vcmp.eq.s32.totalorder %v183, %v65
    %vm310 = vcmp.eq.s32.totalorder %v183, %v66
    %vm311 = vcmp.eq.s32.totalorder %v190, %v65
    %vm312 = vcmp.eq.s32.totalorder %v190, %v66
    %vm313 = vcmp.eq.s32.totalorder %v196, %v65
    %vm314 = vcmp.eq.s32.totalorder %v196, %v66
    %vm315 = vcmp.eq.s32.totalorder %v203, %v65
    %vm316 = vcmp.eq.s32.totalorder %v203, %v66
    %vm317 = vcmp.eq.s32.totalorder %v209, %v65
    %vm318 = vcmp.eq.s32.totalorder %v209, %v66
    %vm319 = vcmp.eq.s32.totalorder %v216, %v65
    %vm320 = vcmp.eq.s32.totalorder %v216, %v66
    %vm321 = vcmp.eq.s32.totalorder %v222, %v65
    %vm322 = vcmp.eq.s32.totalorder %v222, %v66
    %vm323 = vcmp.eq.s32.totalorder %v229, %v65
    %vm324 = vcmp.eq.s32.totalorder %v229, %v66
    %vm325 = vcmp.eq.s32.totalorder %v235, %v65
    %vm326 = vcmp.eq.s32.totalorder %v235, %v66
    %vm327 = vcmp.eq.s32.totalorder %v242, %v65
    %vm328 = vcmp.eq.s32.totalorder %v242, %v66
    %vm329 = vcmp.eq.s32.totalorder %v248, %v65
    %vm330 = vcmp.eq.s32.totalorder %v248, %v66
    %vm331 = vcmp.eq.s32.totalorder %v255, %v65
    %vm332 = vcmp.eq.s32.totalorder %v255, %v66
    %vm333 = vcmp.eq.s32.totalorder %v261, %v65
    %vm334 = vcmp.eq.s32.totalorder %v261, %v66
    %vm335 = vcmp.eq.s32.totalorder %v268, %v65
    %vm336 = vcmp.eq.s32.totalorder %v268, %v66
    %vm337 = vcmp.eq.s32.totalorder %v274, %v65
    %vm338 = vcmp.eq.s32.totalorder %v274, %v66
    %339 = vrot.lane.b32.xlu0 %v62, 127
    %v340 = vpop.permute.xlu0 %339
    %341 = vrot.lane.b32.xlu0 %v63, 127
    %v342 = vpop.permute.xlu0 %341
    %343 = vrot.lane.b32.xlu0 %v62, 15
    %v344 = vpop.permute.xlu0 %343
    %345 = vrot.lane.b32.xlu0 %v63, 15
    %v346 = vpop.permute.xlu0 %345
    %vm347 = vcmask 121856
    %v348 = vsel %vm347, %v340, %v344
    %v349 = vsel %vm347, %v342, %v346
    %v350 = vadd.s32 %v348, 64
    %v351 = vadd.s32 %v349, 64
    %v352 = vperm.slane %v350, 0
    %v353 = vlaneseq
    %v354 = vshrl.u32 %v353, 7
    %356 = vset.pattern.permute.xlu0 %v354
    %357 = vperm.xlu0 %356, %v352
    %v358 = vpop.permute.xlu0 %357
    %v359 = vlaneseq
    %v360 = vshrl.u32 %v359, 7
    %v361 = vadd.s32 %v360, 8
    %362 = vset.pattern.permute.xlu0 %v361
    %363 = vperm.xlu0 %362, %v352
    %v364 = vpop.permute.xlu0 %363
    %v365 = vperm.slane %v350, 1
    %v366 = vlaneseq
    %v367 = vshrl.u32 %v366, 7
    %369 = vset.pattern.permute.xlu0 %v367
    %370 = vperm.xlu0 %369, %v365
    %v371 = vpop.permute.xlu0 %370
    %v372 = vlaneseq
    %v373 = vshrl.u32 %v372, 7
    %v374 = vadd.s32 %v373, 8
    %375 = vset.pattern.permute.xlu0 %v374
    %376 = vperm.xlu0 %375, %v365
    %v377 = vpop.permute.xlu0 %376
    %v378 = vperm.slane %v350, 2
    %v379 = vlaneseq
    %v380 = vshrl.u32 %v379, 7
    %382 = vset.pattern.permute.xlu0 %v380
    %383 = vperm.xlu0 %382, %v378
    %v384 = vpop.permute.xlu0 %383
    %v385 = vlaneseq
    %v386 = vshrl.u32 %v385, 7
    %v387 = vadd.s32 %v386, 8
    %388 = vset.pattern.permute.xlu0 %v387
    %389 = vperm.xlu0 %388, %v378
    %v390 = vpop.permute.xlu0 %389
    %v391 = vperm.slane %v350, 3
    %v392 = vlaneseq
    %v393 = vshrl.u32 %v392, 7
    %395 = vset.pattern.permute.xlu0 %v393
    %396 = vperm.xlu0 %395, %v391
    %v397 = vpop.permute.xlu0 %396
    %v398 = vlaneseq
    %v399 = vshrl.u32 %v398, 7
    %v400 = vadd.s32 %v399, 8
    %401 = vset.pattern.permute.xlu0 %v400
    %402 = vperm.xlu0 %401, %v391
    %v403 = vpop.permute.xlu0 %402
    %v404 = vperm.slane %v350, 4
    %v405 = vlaneseq
    %v406 = vshrl.u32 %v405, 7
    %408 = vset.pattern.permute.xlu0 %v406
    %409 = vperm.xlu0 %408, %v404
    %v410 = vpop.permute.xlu0 %409
    %v411 = vlaneseq
    %v412 = vshrl.u32 %v411, 7
    %v413 = vadd.s32 %v412, 8
    %414 = vset.pattern.permute.xlu0 %v413
    %415 = vperm.xlu0 %414, %v404
    %v416 = vpop.permute.xlu0 %415
    %v417 = vperm.slane %v350, 5
    %v418 = vlaneseq
    %v419 = vshrl.u32 %v418, 7
    %421 = vset.pattern.permute.xlu0 %v419
    %422 = vperm.xlu0 %421, %v417
    %v423 = vpop.permute.xlu0 %422
    %v424 = vlaneseq
    %v425 = vshrl.u32 %v424, 7
    %v426 = vadd.s32 %v425, 8
    %427 = vset.pattern.permute.xlu0 %v426
    %428 = vperm.xlu0 %427, %v417
    %v429 = vpop.permute.xlu0 %428
    %v430 = vperm.slane %v350, 6
    %v431 = vlaneseq
    %v432 = vshrl.u32 %v431, 7
    %434 = vset.pattern.permute.xlu0 %v432
    %435 = vperm.xlu0 %434, %v430
    %v436 = vpop.permute.xlu0 %435
    %v437 = vlaneseq
    %v438 = vshrl.u32 %v437, 7
    %v439 = vadd.s32 %v438, 8
    %440 = vset.pattern.permute.xlu0 %v439
    %441 = vperm.xlu0 %440, %v430
    %v442 = vpop.permute.xlu0 %441
    %v443 = vperm.slane %v350, 7
    %v444 = vlaneseq
    %v445 = vshrl.u32 %v444, 7
    %447 = vset.pattern.permute.xlu0 %v445
    %448 = vperm.xlu0 %447, %v443
    %v449 = vpop.permute.xlu0 %448
    %v450 = vlaneseq
    %v451 = vshrl.u32 %v450, 7
    %v452 = vadd.s32 %v451, 8
    %453 = vset.pattern.permute.xlu0 %v452
    %454 = vperm.xlu0 %453, %v443
    %v455 = vpop.permute.xlu0 %454
    %v456 = vperm.slane %v351, 0
    %v457 = vlaneseq
    %v458 = vshrl.u32 %v457, 7
    %460 = vset.pattern.permute.xlu0 %v458
    %461 = vperm.xlu0 %460, %v456
    %v462 = vpop.permute.xlu0 %461
    %v463 = vlaneseq
    %v464 = vshrl.u32 %v463, 7
    %v465 = vadd.s32 %v464, 8
    %466 = vset.pattern.permute.xlu0 %v465
    %467 = vperm.xlu0 %466, %v456
    %v468 = vpop.permute.xlu0 %467
    %v469 = vperm.slane %v351, 1
    %v470 = vlaneseq
    %v471 = vshrl.u32 %v470, 7
    %473 = vset.pattern.permute.xlu0 %v471
    %474 = vperm.xlu0 %473, %v469
    %v475 = vpop.permute.xlu0 %474
    %v476 = vlaneseq
    %v477 = vshrl.u32 %v476, 7
    %v478 = vadd.s32 %v477, 8
    %479 = vset.pattern.permute.xlu0 %v478
    %480 = vperm.xlu0 %479, %v469
    %v481 = vpop.permute.xlu0 %480
    %v482 = vperm.slane %v351, 2
    %v483 = vlaneseq
    %v484 = vshrl.u32 %v483, 7
    %486 = vset.pattern.permute.xlu0 %v484
    %487 = vperm.xlu0 %486, %v482
    %v488 = vpop.permute.xlu0 %487
    %v489 = vlaneseq
    %v490 = vshrl.u32 %v489, 7
    %v491 = vadd.s32 %v490, 8
    %492 = vset.pattern.permute.xlu0 %v491
    %493 = vperm.xlu0 %492, %v482
    %v494 = vpop.permute.xlu0 %493
    %v495 = vperm.slane %v351, 3
    %v496 = vlaneseq
    %v497 = vshrl.u32 %v496, 7
    %499 = vset.pattern.permute.xlu0 %v497
    %500 = vperm.xlu0 %499, %v495
    %v501 = vpop.permute.xlu0 %500
    %v502 = vlaneseq
    %v503 = vshrl.u32 %v502, 7
    %v504 = vadd.s32 %v503, 8
    %505 = vset.pattern.permute.xlu0 %v504
    %506 = vperm.xlu0 %505, %v495
    %v507 = vpop.permute.xlu0 %506
    %v508 = vperm.slane %v351, 4
    %v509 = vlaneseq
    %v510 = vshrl.u32 %v509, 7
    %512 = vset.pattern.permute.xlu0 %v510
    %513 = vperm.xlu0 %512, %v508
    %v514 = vpop.permute.xlu0 %513
    %v515 = vlaneseq
    %v516 = vshrl.u32 %v515, 7
    %v517 = vadd.s32 %v516, 8
    %518 = vset.pattern.permute.xlu0 %v517
    %519 = vperm.xlu0 %518, %v508
    %v520 = vpop.permute.xlu0 %519
    %v521 = vperm.slane %v351, 5
    %v522 = vlaneseq
    %v523 = vshrl.u32 %v522, 7
    %525 = vset.pattern.permute.xlu0 %v523
    %526 = vperm.xlu0 %525, %v521
    %v527 = vpop.permute.xlu0 %526
    %v528 = vlaneseq
    %v529 = vshrl.u32 %v528, 7
    %v530 = vadd.s32 %v529, 8
    %531 = vset.pattern.permute.xlu0 %v530
    %532 = vperm.xlu0 %531, %v521
    %v533 = vpop.permute.xlu0 %532
    %v534 = vperm.slane %v351, 6
    %v535 = vlaneseq
    %v536 = vshrl.u32 %v535, 7
    %538 = vset.pattern.permute.xlu0 %v536
    %539 = vperm.xlu0 %538, %v534
    %v540 = vpop.permute.xlu0 %539
    %v541 = vlaneseq
    %v542 = vshrl.u32 %v541, 7
    %v543 = vadd.s32 %v542, 8
    %544 = vset.pattern.permute.xlu0 %v543
    %545 = vperm.xlu0 %544, %v534
    %v546 = vpop.permute.xlu0 %545
    %v547 = vperm.slane %v351, 7
    %v548 = vlaneseq
    %v549 = vshrl.u32 %v548, 7
    %551 = vset.pattern.permute.xlu0 %v549
    %552 = vperm.xlu0 %551, %v547
    %v553 = vpop.permute.xlu0 %552
    %v554 = vlaneseq
    %v555 = vshrl.u32 %v554, 7
    %v556 = vadd.s32 %v555, 8
    %557 = vset.pattern.permute.xlu0 %v556
    %558 = vperm.xlu0 %557, %v547
    %v559 = vpop.permute.xlu0 %558
    %vm560 = vcmp.eq.s32.totalorder %v358, %v65
    %vm561 = vcmp.eq.s32.totalorder %v358, %v66
    %vm562 = vcmp.eq.s32.totalorder %v364, %v65
    %vm563 = vcmp.eq.s32.totalorder %v364, %v66
    %vm564 = vcmp.eq.s32.totalorder %v371, %v65
    %vm565 = vcmp.eq.s32.totalorder %v371, %v66
    %vm566 = vcmp.eq.s32.totalorder %v377, %v65
    %vm567 = vcmp.eq.s32.totalorder %v377, %v66
    %vm568 = vcmp.eq.s32.totalorder %v384, %v65
    %vm569 = vcmp.eq.s32.totalorder %v384, %v66
    %vm570 = vcmp.eq.s32.totalorder %v390, %v65
    %vm571 = vcmp.eq.s32.totalorder %v390, %v66
    %vm572 = vcmp.eq.s32.totalorder %v397, %v65
    %vm573 = vcmp.eq.s32.totalorder %v397, %v66
    %vm574 = vcmp.eq.s32.totalorder %v403, %v65
    %vm575 = vcmp.eq.s32.totalorder %v403, %v66
    %vm576 = vcmp.eq.s32.totalorder %v410, %v65
    %vm577 = vcmp.eq.s32.totalorder %v410, %v66
    %vm578 = vcmp.eq.s32.totalorder %v416, %v65
    %vm579 = vcmp.eq.s32.totalorder %v416, %v66
    %vm580 = vcmp.eq.s32.totalorder %v423, %v65
    %vm581 = vcmp.eq.s32.totalorder %v423, %v66
    %vm582 = vcmp.eq.s32.totalorder %v429, %v65
    %vm583 = vcmp.eq.s32.totalorder %v429, %v66
    %vm584 = vcmp.eq.s32.totalorder %v436, %v65
    %vm585 = vcmp.eq.s32.totalorder %v436, %v66
    %vm586 = vcmp.eq.s32.totalorder %v442, %v65
    %vm587 = vcmp.eq.s32.totalorder %v442, %v66
    %vm588 = vcmp.eq.s32.totalorder %v449, %v65
    %vm589 = vcmp.eq.s32.totalorder %v449, %v66
    %vm590 = vcmp.eq.s32.totalorder %v455, %v65
    %vm591 = vcmp.eq.s32.totalorder %v455, %v66
    %vm592 = vcmp.eq.s32.totalorder %v462, %v65
    %vm593 = vcmp.eq.s32.totalorder %v462, %v66
    %vm594 = vcmp.eq.s32.totalorder %v468, %v65
    %vm595 = vcmp.eq.s32.totalorder %v468, %v66
    %vm596 = vcmp.eq.s32.totalorder %v475, %v65
    %vm597 = vcmp.eq.s32.totalorder %v475, %v66
    %vm598 = vcmp.eq.s32.totalorder %v481, %v65
    %vm599 = vcmp.eq.s32.totalorder %v481, %v66
    %vm600 = vcmp.eq.s32.totalorder %v488, %v65
    %vm601 = vcmp.eq.s32.totalorder %v488, %v66
    %vm602 = vcmp.eq.s32.totalorder %v494, %v65
    %vm603 = vcmp.eq.s32.totalorder %v494, %v66
    %vm604 = vcmp.eq.s32.totalorder %v501, %v65
    %vm605 = vcmp.eq.s32.totalorder %v501, %v66
    %vm606 = vcmp.eq.s32.totalorder %v507, %v65
    %vm607 = vcmp.eq.s32.totalorder %v507, %v66
    %vm608 = vcmp.eq.s32.totalorder %v514, %v65
    %vm609 = vcmp.eq.s32.totalorder %v514, %v66
    %vm610 = vcmp.eq.s32.totalorder %v520, %v65
    %vm611 = vcmp.eq.s32.totalorder %v520, %v66
    %vm612 = vcmp.eq.s32.totalorder %v527, %v65
    %vm613 = vcmp.eq.s32.totalorder %v527, %v66
    %vm614 = vcmp.eq.s32.totalorder %v533, %v65
    %vm615 = vcmp.eq.s32.totalorder %v533, %v66
    %vm616 = vcmp.eq.s32.totalorder %v540, %v65
    %vm617 = vcmp.eq.s32.totalorder %v540, %v66
    %vm618 = vcmp.eq.s32.totalorder %v546, %v65
    %vm619 = vcmp.eq.s32.totalorder %v546, %v66
    %vm620 = vcmp.eq.s32.totalorder %v553, %v65
    %vm621 = vcmp.eq.s32.totalorder %v553, %v66
    %vm622 = vcmp.eq.s32.totalorder %v559, %v65
    %vm623 = vcmp.eq.s32.totalorder %v559, %v66
    %vm624 = vmor %vm275, %vm560
    %vm625 = vmor %vm276, %vm561
    %vm626 = vmor %vm277, %vm562
    %vm627 = vmor %vm278, %vm563
    %vm628 = vmor %vm279, %vm564
    %vm629 = vmor %vm280, %vm565
    %vm630 = vmor %vm281, %vm566
    %vm631 = vmor %vm282, %vm567
    %vm632 = vmor %vm283, %vm568
    %vm633 = vmor %vm284, %vm569
    %vm634 = vmor %vm285, %vm570
    %vm635 = vmor %vm286, %vm571
    %vm636 = vmor %vm287, %vm572
    %vm637 = vmor %vm288, %vm573
    %vm638 = vmor %vm289, %vm574
    %vm639 = vmor %vm290, %vm575
    %vm640 = vmor %vm291, %vm576
    %vm641 = vmor %vm292, %vm577
    %vm642 = vmor %vm293, %vm578
    %vm643 = vmor %vm294, %vm579
    %vm644 = vmor %vm295, %vm580
    %vm645 = vmor %vm296, %vm581
    %vm646 = vmor %vm297, %vm582
    %vm647 = vmor %vm298, %vm583
    %vm648 = vmor %vm299, %vm584
    %vm649 = vmor %vm300, %vm585
    %vm650 = vmor %vm301, %vm586
    %vm651 = vmor %vm302, %vm587
    %vm652 = vmor %vm303, %vm588
    %vm653 = vmor %vm304, %vm589
    %vm654 = vmor %vm305, %vm590
    %vm655 = vmor %vm306, %vm591
    %vm656 = vmor %vm307, %vm592
    %vm657 = vmor %vm308, %vm593
    %vm658 = vmor %vm309, %vm594
    %vm659 = vmor %vm310, %vm595
    %vm660 = vmor %vm311, %vm596
    %vm661 = vmor %vm312, %vm597
    %vm662 = vmor %vm313, %vm598
    %vm663 = vmor %vm314, %vm599
    %vm664 = vmor %vm315, %vm600
    %vm665 = vmor %vm316, %vm601
    %vm666 = vmor %vm317, %vm602
    %vm667 = vmor %vm318, %vm603
    %vm668 = vmor %vm319, %vm604
    %vm669 = vmor %vm320, %vm605
    %vm670 = vmor %vm321, %vm606
    %vm671 = vmor %vm322, %vm607
    %vm672 = vmor %vm323, %vm608
    %vm673 = vmor %vm324, %vm609
    %vm674 = vmor %vm325, %vm610
    %vm675 = vmor %vm326, %vm611
    %vm676 = vmor %vm327, %vm612
    %vm677 = vmor %vm328, %vm613
    %vm678 = vmor %vm329, %vm614
    %vm679 = vmor %vm330, %vm615
    %vm680 = vmor %vm331, %vm616
    %vm681 = vmor %vm332, %vm617
    %vm682 = vmor %vm333, %vm618
    %vm683 = vmor %vm334, %vm619
    %vm684 = vmor %vm335, %vm620
    %vm685 = vmor %vm336, %vm621
    %vm686 = vmor %vm337, %vm622
    %vm687 = vmor %vm338, %vm623
    %688 = vrot.lane.b32.xlu0 %v62, 126
    %v689 = vpop.permute.xlu0 %688
    %690 = vrot.lane.b32.xlu0 %v63, 126
    %v691 = vpop.permute.xlu0 %690
    %692 = vrot.lane.b32.xlu0 %v62, 14
    %v693 = vpop.permute.xlu0 %692
    %694 = vrot.lane.b32.xlu0 %v63, 14
    %v695 = vpop.permute.xlu0 %694
    %vm696 = vcmask 113664
    %v697 = vsel %vm696, %v689, %v693
    %v698 = vsel %vm696, %v691, %v695
    %v699 = vadd.s32 %v697, 128
    %v700 = vadd.s32 %v698, 128
    %v701 = vperm.slane %v699, 0
    %v702 = vlaneseq
    %v703 = vshrl.u32 %v702, 7
    %705 = vset.pattern.permute.xlu0 %v703
    %706 = vperm.xlu0 %705, %v701
    %v707 = vpop.permute.xlu0 %706
    %v708 = vlaneseq
    %v709 = vshrl.u32 %v708, 7
    %v710 = vadd.s32 %v709, 8
    %711 = vset.pattern.permute.xlu0 %v710
    %712 = vperm.xlu0 %711, %v701
    %v713 = vpop.permute.xlu0 %712
    %v714 = vperm.slane %v699, 1
    %v715 = vlaneseq
    %v716 = vshrl.u32 %v715, 7
    %718 = vset.pattern.permute.xlu0 %v716
    %719 = vperm.xlu0 %718, %v714
    %v720 = vpop.permute.xlu0 %719
    %v721 = vlaneseq
    %v722 = vshrl.u32 %v721, 7
    %v723 = vadd.s32 %v722, 8
    %724 = vset.pattern.permute.xlu0 %v723
    %725 = vperm.xlu0 %724, %v714
    %v726 = vpop.permute.xlu0 %725
    %v727 = vperm.slane %v699, 2
    %v728 = vlaneseq
    %v729 = vshrl.u32 %v728, 7
    %731 = vset.pattern.permute.xlu0 %v729
    %732 = vperm.xlu0 %731, %v727
    %v733 = vpop.permute.xlu0 %732
    %v734 = vlaneseq
    %v735 = vshrl.u32 %v734, 7
    %v736 = vadd.s32 %v735, 8
    %737 = vset.pattern.permute.xlu0 %v736
    %738 = vperm.xlu0 %737, %v727
    %v739 = vpop.permute.xlu0 %738
    %v740 = vperm.slane %v699, 3
    %v741 = vlaneseq
    %v742 = vshrl.u32 %v741, 7
    %744 = vset.pattern.permute.xlu0 %v742
    %745 = vperm.xlu0 %744, %v740
    %v746 = vpop.permute.xlu0 %745
    %v747 = vlaneseq
    %v748 = vshrl.u32 %v747, 7
    %v749 = vadd.s32 %v748, 8
    %750 = vset.pattern.permute.xlu0 %v749
    %751 = vperm.xlu0 %750, %v740
    %v752 = vpop.permute.xlu0 %751
    %v753 = vperm.slane %v699, 4
    %v754 = vlaneseq
    %v755 = vshrl.u32 %v754, 7
    %757 = vset.pattern.permute.xlu0 %v755
    %758 = vperm.xlu0 %757, %v753
    %v759 = vpop.permute.xlu0 %758
    %v760 = vlaneseq
    %v761 = vshrl.u32 %v760, 7
    %v762 = vadd.s32 %v761, 8
    %763 = vset.pattern.permute.xlu0 %v762
    %764 = vperm.xlu0 %763, %v753
    %v765 = vpop.permute.xlu0 %764
    %v766 = vperm.slane %v699, 5
    %v767 = vlaneseq
    %v768 = vshrl.u32 %v767, 7
    %770 = vset.pattern.permute.xlu0 %v768
    %771 = vperm.xlu0 %770, %v766
    %v772 = vpop.permute.xlu0 %771
    %v773 = vlaneseq
    %v774 = vshrl.u32 %v773, 7
    %v775 = vadd.s32 %v774, 8
    %776 = vset.pattern.permute.xlu0 %v775
    %777 = vperm.xlu0 %776, %v766
    %v778 = vpop.permute.xlu0 %777
    %v779 = vperm.slane %v699, 6
    %v780 = vlaneseq
    %v781 = vshrl.u32 %v780, 7
    %783 = vset.pattern.permute.xlu0 %v781
    %784 = vperm.xlu0 %783, %v779
    %v785 = vpop.permute.xlu0 %784
    %v786 = vlaneseq
    %v787 = vshrl.u32 %v786, 7
    %v788 = vadd.s32 %v787, 8
    %789 = vset.pattern.permute.xlu0 %v788
    %790 = vperm.xlu0 %789, %v779
    %v791 = vpop.permute.xlu0 %790
    %v792 = vperm.slane %v699, 7
    %v793 = vlaneseq
    %v794 = vshrl.u32 %v793, 7
    %796 = vset.pattern.permute.xlu0 %v794
    %797 = vperm.xlu0 %796, %v792
    %v798 = vpop.permute.xlu0 %797
    %v799 = vlaneseq
    %v800 = vshrl.u32 %v799, 7
    %v801 = vadd.s32 %v800, 8
    %802 = vset.pattern.permute.xlu0 %v801
    %803 = vperm.xlu0 %802, %v792
    %v804 = vpop.permute.xlu0 %803
    %v805 = vperm.slane %v700, 0
    %v806 = vlaneseq
    %v807 = vshrl.u32 %v806, 7
    %809 = vset.pattern.permute.xlu0 %v807
    %810 = vperm.xlu0 %809, %v805
    %v811 = vpop.permute.xlu0 %810
    %v812 = vlaneseq
    %v813 = vshrl.u32 %v812, 7
    %v814 = vadd.s32 %v813, 8
    %815 = vset.pattern.permute.xlu0 %v814
    %816 = vperm.xlu0 %815, %v805
    %v817 = vpop.permute.xlu0 %816
    %v818 = vperm.slane %v700, 1
    %v819 = vlaneseq
    %v820 = vshrl.u32 %v819, 7
    %822 = vset.pattern.permute.xlu0 %v820
    %823 = vperm.xlu0 %822, %v818
    %v824 = vpop.permute.xlu0 %823
    %v825 = vlaneseq
    %v826 = vshrl.u32 %v825, 7
    %v827 = vadd.s32 %v826, 8
    %828 = vset.pattern.permute.xlu0 %v827
    %829 = vperm.xlu0 %828, %v818
    %v830 = vpop.permute.xlu0 %829
    %v831 = vperm.slane %v700, 2
    %v832 = vlaneseq
    %v833 = vshrl.u32 %v832, 7
    %835 = vset.pattern.permute.xlu0 %v833
    %836 = vperm.xlu0 %835, %v831
    %v837 = vpop.permute.xlu0 %836
    %v838 = vlaneseq
    %v839 = vshrl.u32 %v838, 7
    %v840 = vadd.s32 %v839, 8
    %841 = vset.pattern.permute.xlu0 %v840
    %842 = vperm.xlu0 %841, %v831
    %v843 = vpop.permute.xlu0 %842
    %v844 = vperm.slane %v700, 3
    %v845 = vlaneseq
    %v846 = vshrl.u32 %v845, 7
    %848 = vset.pattern.permute.xlu0 %v846
    %849 = vperm.xlu0 %848, %v844
    %v850 = vpop.permute.xlu0 %849
    %v851 = vlaneseq
    %v852 = vshrl.u32 %v851, 7
    %v853 = vadd.s32 %v852, 8
    %854 = vset.pattern.permute.xlu0 %v853
    %855 = vperm.xlu0 %854, %v844
    %v856 = vpop.permute.xlu0 %855
    %v857 = vperm.slane %v700, 4
    %v858 = vlaneseq
    %v859 = vshrl.u32 %v858, 7
    %861 = vset.pattern.permute.xlu0 %v859
    %862 = vperm.xlu0 %861, %v857
    %v863 = vpop.permute.xlu0 %862
    %v864 = vlaneseq
    %v865 = vshrl.u32 %v864, 7
    %v866 = vadd.s32 %v865, 8
    %867 = vset.pattern.permute.xlu0 %v866
    %868 = vperm.xlu0 %867, %v857
    %v869 = vpop.permute.xlu0 %868
    %v870 = vperm.slane %v700, 5
    %v871 = vlaneseq
    %v872 = vshrl.u32 %v871, 7
    %874 = vset.pattern.permute.xlu0 %v872
    %875 = vperm.xlu0 %874, %v870
    %v876 = vpop.permute.xlu0 %875
    %v877 = vlaneseq
    %v878 = vshrl.u32 %v877, 7
    %v879 = vadd.s32 %v878, 8
    %880 = vset.pattern.permute.xlu0 %v879
    %881 = vperm.xlu0 %880, %v870
    %v882 = vpop.permute.xlu0 %881
    %v883 = vperm.slane %v700, 6
    %v884 = vlaneseq
    %v885 = vshrl.u32 %v884, 7
    %887 = vset.pattern.permute.xlu0 %v885
    %888 = vperm.xlu0 %887, %v883
    %v889 = vpop.permute.xlu0 %888
    %v890 = vlaneseq
    %v891 = vshrl.u32 %v890, 7
    %v892 = vadd.s32 %v891, 8
    %893 = vset.pattern.permute.xlu0 %v892
    %894 = vperm.xlu0 %893, %v883
    %v895 = vpop.permute.xlu0 %894
    %v896 = vperm.slane %v700, 7
    %v897 = vlaneseq
    %v898 = vshrl.u32 %v897, 7
    %900 = vset.pattern.permute.xlu0 %v898
    %901 = vperm.xlu0 %900, %v896
    %v902 = vpop.permute.xlu0 %901
    %v903 = vlaneseq
    %v904 = vshrl.u32 %v903, 7
    %v905 = vadd.s32 %v904, 8
    %906 = vset.pattern.permute.xlu0 %v905
    %907 = vperm.xlu0 %906, %v896
    %v908 = vpop.permute.xlu0 %907
    %vm909 = vcmp.eq.s32.totalorder %v707, %v65
    %vm910 = vcmp.eq.s32.totalorder %v707, %v66
    %vm911 = vcmp.eq.s32.totalorder %v713, %v65
    %vm912 = vcmp.eq.s32.totalorder %v713, %v66
    %vm913 = vcmp.eq.s32.totalorder %v720, %v65
    %vm914 = vcmp.eq.s32.totalorder %v720, %v66
    %vm915 = vcmp.eq.s32.totalorder %v726, %v65
    %vm916 = vcmp.eq.s32.totalorder %v726, %v66
    %vm917 = vcmp.eq.s32.totalorder %v733, %v65
    %vm918 = vcmp.eq.s32.totalorder %v733, %v66
    %vm919 = vcmp.eq.s32.totalorder %v739, %v65
    %vm920 = vcmp.eq.s32.totalorder %v739, %v66
    %vm921 = vcmp.eq.s32.totalorder %v746, %v65
    %vm922 = vcmp.eq.s32.totalorder %v746, %v66
    %vm923 = vcmp.eq.s32.totalorder %v752, %v65
    %vm924 = vcmp.eq.s32.totalorder %v752, %v66
    %vm925 = vcmp.eq.s32.totalorder %v759, %v65
    %vm926 = vcmp.eq.s32.totalorder %v759, %v66
    %vm927 = vcmp.eq.s32.totalorder %v765, %v65
    %vm928 = vcmp.eq.s32.totalorder %v765, %v66
    %vm929 = vcmp.eq.s32.totalorder %v772, %v65
    %vm930 = vcmp.eq.s32.totalorder %v772, %v66
    %vm931 = vcmp.eq.s32.totalorder %v778, %v65
    %vm932 = vcmp.eq.s32.totalorder %v778, %v66
    %vm933 = vcmp.eq.s32.totalorder %v785, %v65
    %vm934 = vcmp.eq.s32.totalorder %v785, %v66
    %vm935 = vcmp.eq.s32.totalorder %v791, %v65
    %vm936 = vcmp.eq.s32.totalorder %v791, %v66
    %vm937 = vcmp.eq.s32.totalorder %v798, %v65
    %vm938 = vcmp.eq.s32.totalorder %v798, %v66
    %vm939 = vcmp.eq.s32.totalorder %v804, %v65
    %vm940 = vcmp.eq.s32.totalorder %v804, %v66
    %vm941 = vcmp.eq.s32.totalorder %v811, %v65
    %vm942 = vcmp.eq.s32.totalorder %v811, %v66
    %vm943 = vcmp.eq.s32.totalorder %v817, %v65
    %vm944 = vcmp.eq.s32.totalorder %v817, %v66
    %vm945 = vcmp.eq.s32.totalorder %v824, %v65
    %vm946 = vcmp.eq.s32.totalorder %v824, %v66
    %vm947 = vcmp.eq.s32.totalorder %v830, %v65
    %vm948 = vcmp.eq.s32.totalorder %v830, %v66
    %vm949 = vcmp.eq.s32.totalorder %v837, %v65
    %vm950 = vcmp.eq.s32.totalorder %v837, %v66
    %vm951 = vcmp.eq.s32.totalorder %v843, %v65
    %vm952 = vcmp.eq.s32.totalorder %v843, %v66
    %vm953 = vcmp.eq.s32.totalorder %v850, %v65
    %vm954 = vcmp.eq.s32.totalorder %v850, %v66
    %vm955 = vcmp.eq.s32.totalorder %v856, %v65
    %vm956 = vcmp.eq.s32.totalorder %v856, %v66
    %vm957 = vcmp.eq.s32.totalorder %v863, %v65
    %vm958 = vcmp.eq.s32.totalorder %v863, %v66
    %vm959 = vcmp.eq.s32.totalorder %v869, %v65
    %vm960 = vcmp.eq.s32.totalorder %v869, %v66
    %vm961 = vcmp.eq.s32.totalorder %v876, %v65
    %vm962 = vcmp.eq.s32.totalorder %v876, %v66
    %vm963 = vcmp.eq.s32.totalorder %v882, %v65
    %vm964 = vcmp.eq.s32.totalorder %v882, %v66
    %vm965 = vcmp.eq.s32.totalorder %v889, %v65
    %vm966 = vcmp.eq.s32.totalorder %v889, %v66
    %vm967 = vcmp.eq.s32.totalorder %v895, %v65
    %vm968 = vcmp.eq.s32.totalorder %v895, %v66
    %vm969 = vcmp.eq.s32.totalorder %v902, %v65
    %vm970 = vcmp.eq.s32.totalorder %v902, %v66
    %vm971 = vcmp.eq.s32.totalorder %v908, %v65
    %vm972 = vcmp.eq.s32.totalorder %v908, %v66
    %vm973 = vmor %vm624, %vm909
    %vm974 = vmor %vm625, %vm910
    %vm975 = vmor %vm626, %vm911
    %vm976 = vmor %vm627, %vm912
    %vm977 = vmor %vm628, %vm913
    %vm978 = vmor %vm629, %vm914
    %vm979 = vmor %vm630, %vm915
    %vm980 = vmor %vm631, %vm916
    %vm981 = vmor %vm632, %vm917
    %vm982 = vmor %vm633, %vm918
    %vm983 = vmor %vm634, %vm919
    %vm984 = vmor %vm635, %vm920
    %vm985 = vmor %vm636, %vm921
    %vm986 = vmor %vm637, %vm922
    %vm987 = vmor %vm638, %vm923
    %vm988 = vmor %vm639, %vm924
    %vm989 = vmor %vm640, %vm925
    %vm990 = vmor %vm641, %vm926
    %vm991 = vmor %vm642, %vm927
    %vm992 = vmor %vm643, %vm928
    %vm993 = vmor %vm644, %vm929
    %vm994 = vmor %vm645, %vm930
    %vm995 = vmor %vm646, %vm931
    %vm996 = vmor %vm647, %vm932
    %vm997 = vmor %vm648, %vm933
    %vm998 = vmor %vm649, %vm934
    %vm999 = vmor %vm650, %vm935
    %vm1000 = vmor %vm651, %vm936
    %vm1001 = vmor %vm652, %vm937
    %vm1002 = vmor %vm653, %vm938
    %vm1003 = vmor %vm654, %vm939
    %vm1004 = vmor %vm655, %vm940
    %vm1005 = vmor %vm656, %vm941
    %vm1006 = vmor %vm657, %vm942
    %vm1007 = vmor %vm658, %vm943
    %vm1008 = vmor %vm659, %vm944
    %vm1009 = vmor %vm660, %vm945
    %vm1010 = vmor %vm661, %vm946
    %vm1011 = vmor %vm662, %vm947
    %vm1012 = vmor %vm663, %vm948
    %vm1013 = vmor %vm664, %vm949
    %vm1014 = vmor %vm665, %vm950
    %vm1015 = vmor %vm666, %vm951
    %vm1016 = vmor %vm667, %vm952
    %vm1017 = vmor %vm668, %vm953
    %vm1018 = vmor %vm669, %vm954
    %vm1019 = vmor %vm670, %vm955
    %vm1020 = vmor %vm671, %vm956
    %vm1021 = vmor %vm672, %vm957
    %vm1022 = vmor %vm673, %vm958
    %vm1023 = vmor %vm674, %vm959
    %vm1024 = vmor %vm675, %vm960
    %vm1025 = vmor %vm676, %vm961
    %vm1026 = vmor %vm677, %vm962
    %vm1027 = vmor %vm678, %vm963
    %vm1028 = vmor %vm679, %vm964
    %vm1029 = vmor %vm680, %vm965
    %vm1030 = vmor %vm681, %vm966
    %vm1031 = vmor %vm682, %vm967
    %vm1032 = vmor %vm683, %vm968
    %vm1033 = vmor %vm684, %vm969
    %vm1034 = vmor %vm685, %vm970
    %vm1035 = vmor %vm686, %vm971
    %vm1036 = vmor %vm687, %vm972
    %1037 = vrot.lane.b32.xlu0 %v62, 125
    %v1038 = vpop.permute.xlu0 %1037
    %1039 = vrot.lane.b32.xlu0 %v63, 125
    %v1040 = vpop.permute.xlu0 %1039
    %1041 = vrot.lane.b32.xlu0 %v62, 13
    %v1042 = vpop.permute.xlu0 %1041
    %1043 = vrot.lane.b32.xlu0 %v63, 13
    %v1044 = vpop.permute.xlu0 %1043
    %vm1045 = vcmask 105472
    %v1046 = vsel %vm1045, %v1038, %v1042
    %v1047 = vsel %vm1045, %v1040, %v1044
    %v1048 = vadd.s32 %v1046, 192
    %v1049 = vadd.s32 %v1047, 192
    %v1050 = vperm.slane %v1048, 0
    %v1051 = vlaneseq
    %v1052 = vshrl.u32 %v1051, 7
    %1054 = vset.pattern.permute.xlu0 %v1052
    %1055 = vperm.xlu0 %1054, %v1050
    %v1056 = vpop.permute.xlu0 %1055
    %v1057 = vlaneseq
    %v1058 = vshrl.u32 %v1057, 7
    %v1059 = vadd.s32 %v1058, 8
    %1060 = vset.pattern.permute.xlu0 %v1059
    %1061 = vperm.xlu0 %1060, %v1050
    %v1062 = vpop.permute.xlu0 %1061
    %v1063 = vperm.slane %v1048, 1
    %v1064 = vlaneseq
    %v1065 = vshrl.u32 %v1064, 7
    %1067 = vset.pattern.permute.xlu0 %v1065
    %1068 = vperm.xlu0 %1067, %v1063
    %v1069 = vpop.permute.xlu0 %1068
    %v1070 = vlaneseq
    %v1071 = vshrl.u32 %v1070, 7
    %v1072 = vadd.s32 %v1071, 8
    %1073 = vset.pattern.permute.xlu0 %v1072
    %1074 = vperm.xlu0 %1073, %v1063
    %v1075 = vpop.permute.xlu0 %1074
    %v1076 = vperm.slane %v1048, 2
    %v1077 = vlaneseq
    %v1078 = vshrl.u32 %v1077, 7
    %1080 = vset.pattern.permute.xlu0 %v1078
    %1081 = vperm.xlu0 %1080, %v1076
    %v1082 = vpop.permute.xlu0 %1081
    %v1083 = vlaneseq
    %v1084 = vshrl.u32 %v1083, 7
    %v1085 = vadd.s32 %v1084, 8
    %1086 = vset.pattern.permute.xlu0 %v1085
    %1087 = vperm.xlu0 %1086, %v1076
    %v1088 = vpop.permute.xlu0 %1087
    %v1089 = vperm.slane %v1048, 3
    %v1090 = vlaneseq
    %v1091 = vshrl.u32 %v1090, 7
    %1093 = vset.pattern.permute.xlu0 %v1091
    %1094 = vperm.xlu0 %1093, %v1089
    %v1095 = vpop.permute.xlu0 %1094
    %v1096 = vlaneseq
    %v1097 = vshrl.u32 %v1096, 7
    %v1098 = vadd.s32 %v1097, 8
    %1099 = vset.pattern.permute.xlu0 %v1098
    %1100 = vperm.xlu0 %1099, %v1089
    %v1101 = vpop.permute.xlu0 %1100
    %v1102 = vperm.slane %v1048, 4
    %v1103 = vlaneseq
    %v1104 = vshrl.u32 %v1103, 7
    %1106 = vset.pattern.permute.xlu0 %v1104
    %1107 = vperm.xlu0 %1106, %v1102
    %v1108 = vpop.permute.xlu0 %1107
    %v1109 = vlaneseq
    %v1110 = vshrl.u32 %v1109, 7
    %v1111 = vadd.s32 %v1110, 8
    %1112 = vset.pattern.permute.xlu0 %v1111
    %1113 = vperm.xlu0 %1112, %v1102
    %v1114 = vpop.permute.xlu0 %1113
    %v1115 = vperm.slane %v1048, 5
    %v1116 = vlaneseq
    %v1117 = vshrl.u32 %v1116, 7
    %1119 = vset.pattern.permute.xlu0 %v1117
    %1120 = vperm.xlu0 %1119, %v1115
    %v1121 = vpop.permute.xlu0 %1120
    %v1122 = vlaneseq
    %v1123 = vshrl.u32 %v1122, 7
    %v1124 = vadd.s32 %v1123, 8
    %1125 = vset.pattern.permute.xlu0 %v1124
    %1126 = vperm.xlu0 %1125, %v1115
    %v1127 = vpop.permute.xlu0 %1126
    %v1128 = vperm.slane %v1048, 6
    %v1129 = vlaneseq
    %v1130 = vshrl.u32 %v1129, 7
    %1132 = vset.pattern.permute.xlu0 %v1130
    %1133 = vperm.xlu0 %1132, %v1128
    %v1134 = vpop.permute.xlu0 %1133
    %v1135 = vlaneseq
    %v1136 = vshrl.u32 %v1135, 7
    %v1137 = vadd.s32 %v1136, 8
    %1138 = vset.pattern.permute.xlu0 %v1137
    %1139 = vperm.xlu0 %1138, %v1128
    %v1140 = vpop.permute.xlu0 %1139
    %v1141 = vperm.slane %v1048, 7
    %v1142 = vlaneseq
    %v1143 = vshrl.u32 %v1142, 7
    %1145 = vset.pattern.permute.xlu0 %v1143
    %1146 = vperm.xlu0 %1145, %v1141
    %v1147 = vpop.permute.xlu0 %1146
    %v1148 = vlaneseq
    %v1149 = vshrl.u32 %v1148, 7
    %v1150 = vadd.s32 %v1149, 8
    %1151 = vset.pattern.permute.xlu0 %v1150
    %1152 = vperm.xlu0 %1151, %v1141
    %v1153 = vpop.permute.xlu0 %1152
    %v1154 = vperm.slane %v1049, 0
    %v1155 = vlaneseq
    %v1156 = vshrl.u32 %v1155, 7
    %1158 = vset.pattern.permute.xlu0 %v1156
    %1159 = vperm.xlu0 %1158, %v1154
    %v1160 = vpop.permute.xlu0 %1159
    %v1161 = vlaneseq
    %v1162 = vshrl.u32 %v1161, 7
    %v1163 = vadd.s32 %v1162, 8
    %1164 = vset.pattern.permute.xlu0 %v1163
    %1165 = vperm.xlu0 %1164, %v1154
    %v1166 = vpop.permute.xlu0 %1165
    %v1167 = vperm.slane %v1049, 1
    %v1168 = vlaneseq
    %v1169 = vshrl.u32 %v1168, 7
    %1171 = vset.pattern.permute.xlu0 %v1169
    %1172 = vperm.xlu0 %1171, %v1167
    %v1173 = vpop.permute.xlu0 %1172
    %v1174 = vlaneseq
    %v1175 = vshrl.u32 %v1174, 7
    %v1176 = vadd.s32 %v1175, 8
    %1177 = vset.pattern.permute.xlu0 %v1176
    %1178 = vperm.xlu0 %1177, %v1167
    %v1179 = vpop.permute.xlu0 %1178
    %v1180 = vperm.slane %v1049, 2
    %v1181 = vlaneseq
    %v1182 = vshrl.u32 %v1181, 7
    %1184 = vset.pattern.permute.xlu0 %v1182
    %1185 = vperm.xlu0 %1184, %v1180
    %v1186 = vpop.permute.xlu0 %1185
    %v1187 = vlaneseq
    %v1188 = vshrl.u32 %v1187, 7
    %v1189 = vadd.s32 %v1188, 8
    %1190 = vset.pattern.permute.xlu0 %v1189
    %1191 = vperm.xlu0 %1190, %v1180
    %v1192 = vpop.permute.xlu0 %1191
    %v1193 = vperm.slane %v1049, 3
    %v1194 = vlaneseq
    %v1195 = vshrl.u32 %v1194, 7
    %1197 = vset.pattern.permute.xlu0 %v1195
    %1198 = vperm.xlu0 %1197, %v1193
    %v1199 = vpop.permute.xlu0 %1198
    %v1200 = vlaneseq
    %v1201 = vshrl.u32 %v1200, 7
    %v1202 = vadd.s32 %v1201, 8
    %1203 = vset.pattern.permute.xlu0 %v1202
    %1204 = vperm.xlu0 %1203, %v1193
    %v1205 = vpop.permute.xlu0 %1204
    %v1206 = vperm.slane %v1049, 4
    %v1207 = vlaneseq
    %v1208 = vshrl.u32 %v1207, 7
    %1210 = vset.pattern.permute.xlu0 %v1208
    %1211 = vperm.xlu0 %1210, %v1206
    %v1212 = vpop.permute.xlu0 %1211
    %v1213 = vlaneseq
    %v1214 = vshrl.u32 %v1213, 7
    %v1215 = vadd.s32 %v1214, 8
    %1216 = vset.pattern.permute.xlu0 %v1215
    %1217 = vperm.xlu0 %1216, %v1206
    %v1218 = vpop.permute.xlu0 %1217
    %v1219 = vperm.slane %v1049, 5
    %v1220 = vlaneseq
    %v1221 = vshrl.u32 %v1220, 7
    %1223 = vset.pattern.permute.xlu0 %v1221
    %1224 = vperm.xlu0 %1223, %v1219
    %v1225 = vpop.permute.xlu0 %1224
    %v1226 = vlaneseq
    %v1227 = vshrl.u32 %v1226, 7
    %v1228 = vadd.s32 %v1227, 8
    %1229 = vset.pattern.permute.xlu0 %v1228
    %1230 = vperm.xlu0 %1229, %v1219
    %v1231 = vpop.permute.xlu0 %1230
    %v1232 = vperm.slane %v1049, 6
    %v1233 = vlaneseq
    %v1234 = vshrl.u32 %v1233, 7
    %1236 = vset.pattern.permute.xlu0 %v1234
    %1237 = vperm.xlu0 %1236, %v1232
    %v1238 = vpop.permute.xlu0 %1237
    %v1239 = vlaneseq
    %v1240 = vshrl.u32 %v1239, 7
    %v1241 = vadd.s32 %v1240, 8
    %1242 = vset.pattern.permute.xlu0 %v1241
    %1243 = vperm.xlu0 %1242, %v1232
    %v1244 = vpop.permute.xlu0 %1243
    %v1245 = vperm.slane %v1049, 7
    %v1246 = vlaneseq
    %v1247 = vshrl.u32 %v1246, 7
    %1249 = vset.pattern.permute.xlu0 %v1247
    %1250 = vperm.xlu0 %1249, %v1245
    %v1251 = vpop.permute.xlu0 %1250
    %v1252 = vlaneseq
    %v1253 = vshrl.u32 %v1252, 7
    %v1254 = vadd.s32 %v1253, 8
    %1255 = vset.pattern.permute.xlu0 %v1254
    %1256 = vperm.xlu0 %1255, %v1245
    %v1257 = vpop.permute.xlu0 %1256
    %vm1258 = vcmp.eq.s32.totalorder %v1056, %v65
    %vm1259 = vcmp.eq.s32.totalorder %v1056, %v66
    %vm1260 = vcmp.eq.s32.totalorder %v1062, %v65
    %vm1261 = vcmp.eq.s32.totalorder %v1062, %v66
    %vm1262 = vcmp.eq.s32.totalorder %v1069, %v65
    %vm1263 = vcmp.eq.s32.totalorder %v1069, %v66
    %vm1264 = vcmp.eq.s32.totalorder %v1075, %v65
    %vm1265 = vcmp.eq.s32.totalorder %v1075, %v66
    %vm1266 = vcmp.eq.s32.totalorder %v1082, %v65
    %vm1267 = vcmp.eq.s32.totalorder %v1082, %v66
    %vm1268 = vcmp.eq.s32.totalorder %v1088, %v65
    %vm1269 = vcmp.eq.s32.totalorder %v1088, %v66
    %vm1270 = vcmp.eq.s32.totalorder %v1095, %v65
    %vm1271 = vcmp.eq.s32.totalorder %v1095, %v66
    %vm1272 = vcmp.eq.s32.totalorder %v1101, %v65
    %vm1273 = vcmp.eq.s32.totalorder %v1101, %v66
    %vm1274 = vcmp.eq.s32.totalorder %v1108, %v65
    %vm1275 = vcmp.eq.s32.totalorder %v1108, %v66
    %vm1276 = vcmp.eq.s32.totalorder %v1114, %v65
    %vm1277 = vcmp.eq.s32.totalorder %v1114, %v66
    %vm1278 = vcmp.eq.s32.totalorder %v1121, %v65
    %vm1279 = vcmp.eq.s32.totalorder %v1121, %v66
    %vm1280 = vcmp.eq.s32.totalorder %v1127, %v65
    %vm1281 = vcmp.eq.s32.totalorder %v1127, %v66
    %vm1282 = vcmp.eq.s32.totalorder %v1134, %v65
    %vm1283 = vcmp.eq.s32.totalorder %v1134, %v66
    %vm1284 = vcmp.eq.s32.totalorder %v1140, %v65
    %vm1285 = vcmp.eq.s32.totalorder %v1140, %v66
    %vm1286 = vcmp.eq.s32.totalorder %v1147, %v65
    %vm1287 = vcmp.eq.s32.totalorder %v1147, %v66
    %vm1288 = vcmp.eq.s32.totalorder %v1153, %v65
    %vm1289 = vcmp.eq.s32.totalorder %v1153, %v66
    %vm1290 = vcmp.eq.s32.totalorder %v1160, %v65
    %vm1291 = vcmp.eq.s32.totalorder %v1160, %v66
    %vm1292 = vcmp.eq.s32.totalorder %v1166, %v65
    %vm1293 = vcmp.eq.s32.totalorder %v1166, %v66
    %vm1294 = vcmp.eq.s32.totalorder %v1173, %v65
    %vm1295 = vcmp.eq.s32.totalorder %v1173, %v66
    %vm1296 = vcmp.eq.s32.totalorder %v1179, %v65
    %vm1297 = vcmp.eq.s32.totalorder %v1179, %v66
    %vm1298 = vcmp.eq.s32.totalorder %v1186, %v65
    %vm1299 = vcmp.eq.s32.totalorder %v1186, %v66
    %vm1300 = vcmp.eq.s32.totalorder %v1192, %v65
    %vm1301 = vcmp.eq.s32.totalorder %v1192, %v66
    %vm1302 = vcmp.eq.s32.totalorder %v1199, %v65
    %vm1303 = vcmp.eq.s32.totalorder %v1199, %v66
    %vm1304 = vcmp.eq.s32.totalorder %v1205, %v65
    %vm1305 = vcmp.eq.s32.totalorder %v1205, %v66
    %vm1306 = vcmp.eq.s32.totalorder %v1212, %v65
    %vm1307 = vcmp.eq.s32.totalorder %v1212, %v66
    %vm1308 = vcmp.eq.s32.totalorder %v1218, %v65
    %vm1309 = vcmp.eq.s32.totalorder %v1218, %v66
    %vm1310 = vcmp.eq.s32.totalorder %v1225, %v65
    %vm1311 = vcmp.eq.s32.totalorder %v1225, %v66
    %vm1312 = vcmp.eq.s32.totalorder %v1231, %v65
    %vm1313 = vcmp.eq.s32.totalorder %v1231, %v66
    %vm1314 = vcmp.eq.s32.totalorder %v1238, %v65
    %vm1315 = vcmp.eq.s32.totalorder %v1238, %v66
    %vm1316 = vcmp.eq.s32.totalorder %v1244, %v65
    %vm1317 = vcmp.eq.s32.totalorder %v1244, %v66
    %vm1318 = vcmp.eq.s32.totalorder %v1251, %v65
    %vm1319 = vcmp.eq.s32.totalorder %v1251, %v66
    %vm1320 = vcmp.eq.s32.totalorder %v1257, %v65
    %vm1321 = vcmp.eq.s32.totalorder %v1257, %v66
    %vm1322 = vmor %vm973, %vm1258
    %vm1323 = vmor %vm974, %vm1259
    %vm1324 = vmor %vm975, %vm1260
    %vm1325 = vmor %vm976, %vm1261
    %vm1326 = vmor %vm977, %vm1262
    %vm1327 = vmor %vm978, %vm1263
    %vm1328 = vmor %vm979, %vm1264
    %vm1329 = vmor %vm980, %vm1265
    %vm1330 = vmor %vm981, %vm1266
    %vm1331 = vmor %vm982, %vm1267
    %vm1332 = vmor %vm983, %vm1268
    %vm1333 = vmor %vm984, %vm1269
    %vm1334 = vmor %vm985, %vm1270
    %vm1335 = vmor %vm986, %vm1271
    %vm1336 = vmor %vm987, %vm1272
    %vm1337 = vmor %vm988, %vm1273
    %vm1338 = vmor %vm989, %vm1274
    %vm1339 = vmor %vm990, %vm1275
    %vm1340 = vmor %vm991, %vm1276
    %vm1341 = vmor %vm992, %vm1277
    %vm1342 = vmor %vm993, %vm1278
    %vm1343 = vmor %vm994, %vm1279
    %vm1344 = vmor %vm995, %vm1280
    %vm1345 = vmor %vm996, %vm1281
    %vm1346 = vmor %vm997, %vm1282
    %vm1347 = vmor %vm998, %vm1283
    %vm1348 = vmor %vm999, %vm1284
    %vm1349 = vmor %vm1000, %vm1285
    %vm1350 = vmor %vm1001, %vm1286
    %vm1351 = vmor %vm1002, %vm1287
    %vm1352 = vmor %vm1003, %vm1288
    %vm1353 = vmor %vm1004, %vm1289
    %vm1354 = vmor %vm1005, %vm1290
    %vm1355 = vmor %vm1006, %vm1291
    %vm1356 = vmor %vm1007, %vm1292
    %vm1357 = vmor %vm1008, %vm1293
    %vm1358 = vmor %vm1009, %vm1294
    %vm1359 = vmor %vm1010, %vm1295
    %vm1360 = vmor %vm1011, %vm1296
    %vm1361 = vmor %vm1012, %vm1297
    %vm1362 = vmor %vm1013, %vm1298
    %vm1363 = vmor %vm1014, %vm1299
    %vm1364 = vmor %vm1015, %vm1300
    %vm1365 = vmor %vm1016, %vm1301
    %vm1366 = vmor %vm1017, %vm1302
    %vm1367 = vmor %vm1018, %vm1303
    %vm1368 = vmor %vm1019, %vm1304
    %vm1369 = vmor %vm1020, %vm1305
    %vm1370 = vmor %vm1021, %vm1306
    %vm1371 = vmor %vm1022, %vm1307
    %vm1372 = vmor %vm1023, %vm1308
    %vm1373 = vmor %vm1024, %vm1309
    %vm1374 = vmor %vm1025, %vm1310
    %vm1375 = vmor %vm1026, %vm1311
    %vm1376 = vmor %vm1027, %vm1312
    %vm1377 = vmor %vm1028, %vm1313
    %vm1378 = vmor %vm1029, %vm1314
    %vm1379 = vmor %vm1030, %vm1315
    %vm1380 = vmor %vm1031, %vm1316
    %vm1381 = vmor %vm1032, %vm1317
    %vm1382 = vmor %vm1033, %vm1318
    %vm1383 = vmor %vm1034, %vm1319
    %vm1384 = vmor %vm1035, %vm1320
    %vm1385 = vmor %vm1036, %vm1321
    %v1386 = vsel %vm1322, 1, 0
    %v1387 = vsel %vm1323, 1, 0
    %v1388 = vsel %vm1324, 1, 0
    %v1389 = vsel %vm1325, 1, 0
    %v1390 = vsel %vm1326, 1, 0
    %v1391 = vsel %vm1327, 1, 0
    %v1392 = vsel %vm1328, 1, 0
    %v1393 = vsel %vm1329, 1, 0
    %v1394 = vsel %vm1330, 1, 0
    %v1395 = vsel %vm1331, 1, 0
    %v1396 = vsel %vm1332, 1, 0
    %v1397 = vsel %vm1333, 1, 0
    %v1398 = vsel %vm1334, 1, 0
    %v1399 = vsel %vm1335, 1, 0
    %v1400 = vsel %vm1336, 1, 0
    %v1401 = vsel %vm1337, 1, 0
    %v1402 = vsel %vm1338, 1, 0
    %v1403 = vsel %vm1339, 1, 0
    %v1404 = vsel %vm1340, 1, 0
    %v1405 = vsel %vm1341, 1, 0
    %v1406 = vsel %vm1342, 1, 0
    %v1407 = vsel %vm1343, 1, 0
    %v1408 = vsel %vm1344, 1, 0
    %v1409 = vsel %vm1345, 1, 0
    %v1410 = vsel %vm1346, 1, 0
    %v1411 = vsel %vm1347, 1, 0
    %v1412 = vsel %vm1348, 1, 0
    %v1413 = vsel %vm1349, 1, 0
    %v1414 = vsel %vm1350, 1, 0
    %v1415 = vsel %vm1351, 1, 0
    %v1416 = vsel %vm1352, 1, 0
    %v1417 = vsel %vm1353, 1, 0
    %v1418 = vsel %vm1354, 1, 0
    %v1419 = vsel %vm1355, 1, 0
    %v1420 = vsel %vm1356, 1, 0
    %v1421 = vsel %vm1357, 1, 0
    %v1422 = vsel %vm1358, 1, 0
    %v1423 = vsel %vm1359, 1, 0
    %v1424 = vsel %vm1360, 1, 0
    %v1425 = vsel %vm1361, 1, 0
    %v1426 = vsel %vm1362, 1, 0
    %v1427 = vsel %vm1363, 1, 0
    %v1428 = vsel %vm1364, 1, 0
    %v1429 = vsel %vm1365, 1, 0
    %v1430 = vsel %vm1366, 1, 0
    %v1431 = vsel %vm1367, 1, 0
    %v1432 = vsel %vm1368, 1, 0
    %v1433 = vsel %vm1369, 1, 0
    %v1434 = vsel %vm1370, 1, 0
    %v1435 = vsel %vm1371, 1, 0
    %v1436 = vsel %vm1372, 1, 0
    %v1437 = vsel %vm1373, 1, 0
    %v1438 = vsel %vm1374, 1, 0
    %v1439 = vsel %vm1375, 1, 0
    %v1440 = vsel %vm1376, 1, 0
    %v1441 = vsel %vm1377, 1, 0
    %v1442 = vsel %vm1378, 1, 0
    %v1443 = vsel %vm1379, 1, 0
    %v1444 = vsel %vm1380, 1, 0
    %v1445 = vsel %vm1381, 1, 0
    %v1446 = vsel %vm1382, 1, 0
    %v1447 = vsel %vm1383, 1, 0
    %v1448 = vsel %vm1384, 1, 0
    %v1449 = vsel %vm1385, 1, 0
    %v1450 = vcvt.s32.f32 %v1386
    %v1451 = vcvt.s32.f32 %v1387
    %v1452 = vcvt.s32.f32 %v1388
    %v1453 = vcvt.s32.f32 %v1389
    %v1454 = vcvt.s32.f32 %v1390
    %v1455 = vcvt.s32.f32 %v1391
    %v1456 = vcvt.s32.f32 %v1392
    %v1457 = vcvt.s32.f32 %v1393
    %v1458 = vcvt.s32.f32 %v1394
    %v1459 = vcvt.s32.f32 %v1395
    %v1460 = vcvt.s32.f32 %v1396
    %v1461 = vcvt.s32.f32 %v1397
    %v1462 = vcvt.s32.f32 %v1398
    %v1463 = vcvt.s32.f32 %v1399
    %v1464 = vcvt.s32.f32 %v1400
    %v1465 = vcvt.s32.f32 %v1401
    %v1466 = vcvt.s32.f32 %v1402
    %v1467 = vcvt.s32.f32 %v1403
    %v1468 = vcvt.s32.f32 %v1404
    %v1469 = vcvt.s32.f32 %v1405
    %v1470 = vcvt.s32.f32 %v1406
    %v1471 = vcvt.s32.f32 %v1407
    %v1472 = vcvt.s32.f32 %v1408
    %v1473 = vcvt.s32.f32 %v1409
    %v1474 = vcvt.s32.f32 %v1410
    %v1475 = vcvt.s32.f32 %v1411
    %v1476 = vcvt.s32.f32 %v1412
    %v1477 = vcvt.s32.f32 %v1413
    %v1478 = vcvt.s32.f32 %v1414
    %v1479 = vcvt.s32.f32 %v1415
    %v1480 = vcvt.s32.f32 %v1416
    %v1481 = vcvt.s32.f32 %v1417
    %v1482 = vcvt.s32.f32 %v1418
    %v1483 = vcvt.s32.f32 %v1419
    %v1484 = vcvt.s32.f32 %v1420
    %v1485 = vcvt.s32.f32 %v1421
    %v1486 = vcvt.s32.f32 %v1422
    %v1487 = vcvt.s32.f32 %v1423
    %v1488 = vcvt.s32.f32 %v1424
    %v1489 = vcvt.s32.f32 %v1425
    %v1490 = vcvt.s32.f32 %v1426
    %v1491 = vcvt.s32.f32 %v1427
    %v1492 = vcvt.s32.f32 %v1428
    %v1493 = vcvt.s32.f32 %v1429
    %v1494 = vcvt.s32.f32 %v1430
    %v1495 = vcvt.s32.f32 %v1431
    %v1496 = vcvt.s32.f32 %v1432
    %v1497 = vcvt.s32.f32 %v1433
    %v1498 = vcvt.s32.f32 %v1434
    %v1499 = vcvt.s32.f32 %v1435
    %v1500 = vcvt.s32.f32 %v1436
    %v1501 = vcvt.s32.f32 %v1437
    %v1502 = vcvt.s32.f32 %v1438
    %v1503 = vcvt.s32.f32 %v1439
    %v1504 = vcvt.s32.f32 %v1440
    %v1505 = vcvt.s32.f32 %v1441
    %v1506 = vcvt.s32.f32 %v1442
    %v1507 = vcvt.s32.f32 %v1443
    %v1508 = vcvt.s32.f32 %v1444
    %v1509 = vcvt.s32.f32 %v1445
    %v1510 = vcvt.s32.f32 %v1446
    %v1511 = vcvt.s32.f32 %v1447
    %v1512 = vcvt.s32.f32 %v1448
    %v1513 = vcvt.s32.f32 %v1449
    %v1514 = vpack.c.bf16 %v1451, %v1450
    %v1515 = vpack.c.bf16 %v1453, %v1452
    %v1516 = vpack.c.bf16 %v1455, %v1454
    %v1517 = vpack.c.bf16 %v1457, %v1456
    %v1518 = vpack.c.bf16 %v1459, %v1458
    %v1519 = vpack.c.bf16 %v1461, %v1460
    %v1520 = vpack.c.bf16 %v1463, %v1462
    %v1521 = vpack.c.bf16 %v1465, %v1464
    %v1522 = vpack.c.bf16 %v1467, %v1466
    %v1523 = vpack.c.bf16 %v1469, %v1468
    %v1524 = vpack.c.bf16 %v1471, %v1470
    %v1525 = vpack.c.bf16 %v1473, %v1472
    %v1526 = vpack.c.bf16 %v1475, %v1474
    %v1527 = vpack.c.bf16 %v1477, %v1476
    %v1528 = vpack.c.bf16 %v1479, %v1478
    %v1529 = vpack.c.bf16 %v1481, %v1480
    %v1530 = vpack.c.bf16 %v1483, %v1482
    %v1531 = vpack.c.bf16 %v1485, %v1484
    %v1532 = vpack.c.bf16 %v1487, %v1486
    %v1533 = vpack.c.bf16 %v1489, %v1488
    %v1534 = vpack.c.bf16 %v1491, %v1490
    %v1535 = vpack.c.bf16 %v1493, %v1492
    %v1536 = vpack.c.bf16 %v1495, %v1494
    %v1537 = vpack.c.bf16 %v1497, %v1496
    %v1538 = vpack.c.bf16 %v1499, %v1498
    %v1539 = vpack.c.bf16 %v1501, %v1500
    %v1540 = vpack.c.bf16 %v1503, %v1502
    %v1541 = vpack.c.bf16 %v1505, %v1504
    %v1542 = vpack.c.bf16 %v1507, %v1506
    %v1543 = vpack.c.bf16 %v1509, %v1508
    %v1544 = vpack.c.bf16 %v1511, %v1510
    %v1545 = vpack.c.bf16 %v1513, %v1512
    %v1546 = vld [vmem:[#allocation5] sm:$0xf]
    %v1547 = vld [vmem:[#allocation5 + $0x4] sm:$0xf]
    %v1548 = vld [vmem:[#allocation5 + $0x8] sm:$0xf]
    %v1549 = vld [vmem:[#allocation5 + $0xc] sm:$0xf]
    %v1550 = vld [vmem:[#allocation5 + $0x10] sm:$0xf]
    %v1551 = vld [vmem:[#allocation5 + $0x14] sm:$0xf]
    %v1552 = vld [vmem:[#allocation5 + $0x18] sm:$0xf]
    %v1553 = vld [vmem:[#allocation5 + $0x1c] sm:$0xf]
    %v1554 = vld [vmem:[#allocation5 + $0x20] sm:$0xf]
    %v1555 = vld [vmem:[#allocation5 + $0x24] sm:$0xf]
    %v1556 = vld [vmem:[#allocation5 + $0x28] sm:$0xf]
    %v1557 = vld [vmem:[#allocation5 + $0x2c] sm:$0xf]
    %v1558 = vld [vmem:[#allocation5 + $0x30] sm:$0xf]
    %v1559 = vld [vmem:[#allocation5 + $0x34] sm:$0xf]
    %v1560 = vld [vmem:[#allocation5 + $0x38] sm:$0xf]
    %v1561 = vld [vmem:[#allocation5 + $0x3c] sm:$0xf]
    %v1562 = vld [vmem:[#allocation5 + $0x40] sm:$0xf]
    %v1563 = vld [vmem:[#allocation5 + $0x44] sm:$0xf]
    %v1564 = vld [vmem:[#allocation5 + $0x48] sm:$0xf]
    %v1565 = vld [vmem:[#allocation5 + $0x4c] sm:$0xf]
    %v1566 = vld [vmem:[#allocation5 + $0x50] sm:$0xf]
    %v1567 = vld [vmem:[#allocation5 + $0x54] sm:$0xf]
    %v1568 = vld [vmem:[#allocation5 + $0x58] sm:$0xf]
    %v1569 = vld [vmem:[#allocation5 + $0x5c] sm:$0xf]
    %v1570 = vld [vmem:[#allocation5 + $0x60] sm:$0xf]
    %v1571 = vld [vmem:[#allocation5 + $0x64] sm:$0xf]
    %v1572 = vld [vmem:[#allocation5 + $0x68] sm:$0xf]
    %v1573 = vld [vmem:[#allocation5 + $0x6c] sm:$0xf]
    %v1574 = vld [vmem:[#allocation5 + $0x70] sm:$0xf]
    %v1575 = vld [vmem:[#allocation5 + $0x74] sm:$0xf]
    %v1576 = vld [vmem:[#allocation5 + $0x78] sm:$0xf]
    %v1577 = vld [vmem:[#allocation5 + $0x7c] sm:$0xf]
    %v1610 = vunpack.c.l.b16 %v1514
    %v1611 = vunpack.c.h.b16 %v1514
    %v1612 = vunpack.c.l.b16 %v1515
    %v1613 = vunpack.c.h.b16 %v1515
    %v1614 = vunpack.c.l.b16 %v1516
    %v1615 = vunpack.c.h.b16 %v1516
    %v1616 = vunpack.c.l.b16 %v1517
    %v1617 = vunpack.c.h.b16 %v1517
    %v1618 = vunpack.c.l.b16 %v1518
    %v1619 = vunpack.c.h.b16 %v1518
    %v1620 = vunpack.c.l.b16 %v1519
    %v1621 = vunpack.c.h.b16 %v1519
    %v1622 = vunpack.c.l.b16 %v1520
    %v1623 = vunpack.c.h.b16 %v1520
    %v1624 = vunpack.c.l.b16 %v1521
    %v1625 = vunpack.c.h.b16 %v1521
    %v1626 = vunpack.c.l.b16 %v1522
    %v1627 = vunpack.c.h.b16 %v1522
    %v1628 = vunpack.c.l.b16 %v1523
    %v1629 = vunpack.c.h.b16 %v1523
    %v1630 = vunpack.c.l.b16 %v1524
    %v1631 = vunpack.c.h.b16 %v1524
    %v1632 = vunpack.c.l.b16 %v1525
    %v1633 = vunpack.c.h.b16 %v1525
    %v1634 = vunpack.c.l.b16 %v1526
    %v1635 = vunpack.c.h.b16 %v1526
    %v1636 = vunpack.c.l.b16 %v1527
    %v1637 = vunpack.c.h.b16 %v1527
    %v1638 = vunpack.c.l.b16 %v1528
    %v1639 = vunpack.c.h.b16 %v1528
    %v1640 = vunpack.c.l.b16 %v1529
    %v1641 = vunpack.c.h.b16 %v1529
    %v1642 = vunpack.c.l.b16 %v1530
    %v1643 = vunpack.c.h.b16 %v1530
    %v1644 = vunpack.c.l.b16 %v1531
    %v1645 = vunpack.c.h.b16 %v1531
    %v1646 = vunpack.c.l.b16 %v1532
    %v1647 = vunpack.c.h.b16 %v1532
    %v1648 = vunpack.c.l.b16 %v1533
    %v1649 = vunpack.c.h.b16 %v1533
    %v1650 = vunpack.c.l.b16 %v1534
    %v1651 = vunpack.c.h.b16 %v1534
    %v1652 = vunpack.c.l.b16 %v1535
    %v1653 = vunpack.c.h.b16 %v1535
    %v1654 = vunpack.c.l.b16 %v1536
    %v1655 = vunpack.c.h.b16 %v1536
    %v1656 = vunpack.c.l.b16 %v1537
    %v1657 = vunpack.c.h.b16 %v1537
    %v1658 = vunpack.c.l.b16 %v1538
    %v1659 = vunpack.c.h.b16 %v1538
    %v1660 = vunpack.c.l.b16 %v1539
    %v1661 = vunpack.c.h.b16 %v1539
    %v1662 = vunpack.c.l.b16 %v1540
    %v1663 = vunpack.c.h.b16 %v1540
    %v1664 = vunpack.c.l.b16 %v1541
    %v1665 = vunpack.c.h.b16 %v1541
    %v1666 = vunpack.c.l.b16 %v1542
    %v1667 = vunpack.c.h.b16 %v1542
    %v1668 = vunpack.c.l.b16 %v1543
    %v1669 = vunpack.c.h.b16 %v1543
    %v1670 = vunpack.c.l.b16 %v1544
    %v1671 = vunpack.c.h.b16 %v1544
    %v1672 = vunpack.c.l.b16 %v1545
    %v1673 = vunpack.c.h.b16 %v1545
    %v1674 = vpack.c.b16 %v1612, %v1610
    %v1675 = vpack.c.b16 %v1613, %v1611
    %v1676 = vpack.c.b16 %v1616, %v1614
    %v1677 = vpack.c.b16 %v1617, %v1615
    %v1678 = vpack.c.b16 %v1620, %v1618
    %v1679 = vpack.c.b16 %v1621, %v1619
    %v1680 = vpack.c.b16 %v1624, %v1622
    %v1681 = vpack.c.b16 %v1625, %v1623
    %v1682 = vpack.c.b16 %v1628, %v1626
    %v1683 = vpack.c.b16 %v1629, %v1627
    %v1684 = vpack.c.b16 %v1632, %v1630
    %v1685 = vpack.c.b16 %v1633, %v1631
    %v1686 = vpack.c.b16 %v1636, %v1634
    %v1687 = vpack.c.b16 %v1637, %v1635
    %v1688 = vpack.c.b16 %v1640, %v1638
    %v1689 = vpack.c.b16 %v1641, %v1639
    %v1690 = vpack.c.b16 %v1644, %v1642
    %v1691 = vpack.c.b16 %v1645, %v1643
    %v1692 = vpack.c.b16 %v1648, %v1646
    %v1693 = vpack.c.b16 %v1649, %v1647
    %v1694 = vpack.c.b16 %v1652, %v1650
    %v1695 = vpack.c.b16 %v1653, %v1651
    %v1696 = vpack.c.b16 %v1656, %v1654
    %v1697 = vpack.c.b16 %v1657, %v1655
    %v1698 = vpack.c.b16 %v1660, %v1658
    %v1699 = vpack.c.b16 %v1661, %v1659
    %v1700 = vpack.c.b16 %v1664, %v1662
    %v1701 = vpack.c.b16 %v1665, %v1663
    %v1702 = vpack.c.b16 %v1668, %v1666
    %v1703 = vpack.c.b16 %v1669, %v1667
    %v1704 = vpack.c.b16 %v1672, %v1670
    %v1705 = vpack.c.b16 %v1673, %v1671
    %v1770 = vunpack.c.l.b16 %v1546
    %v1771 = vunpack.c.l.b16 %v1547
    %v1772 = vunpack.c.l.b16 %v1548
    %v1773 = vunpack.c.l.b16 %v1549
    %v1774 = vunpack.c.l.b16 %v1550
    %v1775 = vunpack.c.l.b16 %v1551
    %v1776 = vunpack.c.l.b16 %v1552
    %v1777 = vunpack.c.l.b16 %v1553
    %v1778 = vunpack.c.l.b16 %v1554
    %v1779 = vunpack.c.l.b16 %v1555
    %v1780 = vunpack.c.l.b16 %v1556
    %v1781 = vunpack.c.l.b16 %v1557
    %v1782 = vunpack.c.l.b16 %v1558
    %v1783 = vunpack.c.l.b16 %v1559
    %v1784 = vunpack.c.l.b16 %v1560
    %v1785 = vunpack.c.l.b16 %v1561
    %v1786 = vunpack.c.l.b16 %v1562
    %v1787 = vunpack.c.l.b16 %v1563
    %v1788 = vunpack.c.l.b16 %v1564
    %v1789 = vunpack.c.l.b16 %v1565
    %v1790 = vunpack.c.l.b16 %v1566
    %v1791 = vunpack.c.l.b16 %v1567
    %v1792 = vunpack.c.l.b16 %v1568
    %v1793 = vunpack.c.l.b16 %v1569
    %v1794 = vunpack.c.l.b16 %v1570
    %v1795 = vunpack.c.l.b16 %v1571
    %v1796 = vunpack.c.l.b16 %v1572
    %v1797 = vunpack.c.l.b16 %v1573
    %v1798 = vunpack.c.l.b16 %v1574
    %v1799 = vunpack.c.l.b16 %v1575
    %v1800 = vunpack.c.l.b16 %v1576
    %v1801 = vunpack.c.l.b16 %v1577
    %v1802 = vpack.c.b16 %v1771, %v1770
    %v1803 = vpack.c.b16 %v1773, %v1772
    %v1804 = vpack.c.b16 %v1775, %v1774
    %v1805 = vpack.c.b16 %v1777, %v1776
    %v1806 = vpack.c.b16 %v1779, %v1778
    %v1807 = vpack.c.b16 %v1781, %v1780
    %v1808 = vpack.c.b16 %v1783, %v1782
    %v1809 = vpack.c.b16 %v1785, %v1784
    %v1810 = vpack.c.b16 %v1787, %v1786
    %v1811 = vpack.c.b16 %v1789, %v1788
    %v1812 = vpack.c.b16 %v1791, %v1790
    %v1813 = vpack.c.b16 %v1793, %v1792
    %v1814 = vpack.c.b16 %v1795, %v1794
    %v1815 = vpack.c.b16 %v1797, %v1796
    %v1816 = vpack.c.b16 %v1799, %v1798
    %v1817 = vpack.c.b16 %v1801, %v1800
    %1834 = vmatpush.bf16.msra.mxu0 %v1809
    %1835 = vmatpush.bf16.msra.mxu0 %v1808
    %1836 = vmatpush.bf16.msra.mxu0 %v1807
    %1837 = vmatpush.bf16.msra.mxu0 %v1806
    %1838 = vmatpush.bf16.msra.mxu0 %v1805
    %1839 = vmatpush.bf16.msra.mxu0 %v1804
    %1840 = vmatpush.bf16.msra.mxu0 %v1803
    %1841 = vmatpush.bf16.msra.mxu0 %v1802
    %1842 = vmatmul.bf16.gmra.mxu0 %v1674
    %v1843 = vpop.f32.mrf.mxu0
    %v1844 = vadd.f32 0.0, %v1843
    %v1845 = vpop.f32.mrf.mxu0
    %v1846 = vadd.f32 0.0, %v1845
    %1847 = vmatmul.bf16.gmra.mxu0 %v1676
    %v1848 = vpop.f32.mrf.mxu0
    %v1849 = vadd.f32 0.0, %v1848
    %v1850 = vpop.f32.mrf.mxu0
    %v1851 = vadd.f32 0.0, %v1850
    %1852 = vmatmul.bf16.gmra.mxu0 %v1678
    %v1853 = vpop.f32.mrf.mxu0
    %v1854 = vadd.f32 0.0, %v1853
    %v1855 = vpop.f32.mrf.mxu0
    %v1856 = vadd.f32 0.0, %v1855
    %1857 = vmatmul.bf16.gmra.mxu0 %v1680
    %v1858 = vpop.f32.mrf.mxu0
    %v1859 = vadd.f32 0.0, %v1858
    %v1860 = vpop.f32.mrf.mxu0
    %v1861 = vadd.f32 0.0, %v1860
    %1862 = vmatmul.bf16.gmra.mxu0 %v1682
    %v1863 = vpop.f32.mrf.mxu0
    %v1864 = vadd.f32 0.0, %v1863
    %v1865 = vpop.f32.mrf.mxu0
    %v1866 = vadd.f32 0.0, %v1865
    %1867 = vmatmul.bf16.gmra.mxu0 %v1684
    %v1868 = vpop.f32.mrf.mxu0
    %v1869 = vadd.f32 0.0, %v1868
    %v1870 = vpop.f32.mrf.mxu0
    %v1871 = vadd.f32 0.0, %v1870
    %1872 = vmatmul.bf16.gmra.mxu0 %v1686
    %v1873 = vpop.f32.mrf.mxu0
    %v1874 = vadd.f32 0.0, %v1873
    %v1875 = vpop.f32.mrf.mxu0
    %v1876 = vadd.f32 0.0, %v1875
    %1877 = vmatmul.bf16.gmra.mxu0 %v1688
    %v1878 = vpop.f32.mrf.mxu0
    %v1879 = vadd.f32 0.0, %v1878
    %v1880 = vpop.f32.mrf.mxu0
    %v1881 = vadd.f32 0.0, %v1880
    %1882 = vmatmul.bf16.gmra.mxu0 %v1690
    %v1883 = vpop.f32.mrf.mxu0
    %v1884 = vadd.f32 0.0, %v1883
    %v1885 = vpop.f32.mrf.mxu0
    %v1886 = vadd.f32 0.0, %v1885
    %1887 = vmatmul.bf16.gmra.mxu0 %v1692
    %v1888 = vpop.f32.mrf.mxu0
    %v1889 = vadd.f32 0.0, %v1888
    %v1890 = vpop.f32.mrf.mxu0
    %v1891 = vadd.f32 0.0, %v1890
    %1892 = vmatmul.bf16.gmra.mxu0 %v1694
    %v1893 = vpop.f32.mrf.mxu0
    %v1894 = vadd.f32 0.0, %v1893
    %v1895 = vpop.f32.mrf.mxu0
    %v1896 = vadd.f32 0.0, %v1895
    %1897 = vmatmul.bf16.gmra.mxu0 %v1696
    %v1898 = vpop.f32.mrf.mxu0
    %v1899 = vadd.f32 0.0, %v1898
    %v1900 = vpop.f32.mrf.mxu0
    %v1901 = vadd.f32 0.0, %v1900
    %1902 = vmatmul.bf16.gmra.mxu0 %v1698
    %v1903 = vpop.f32.mrf.mxu0
    %v1904 = vadd.f32 0.0, %v1903
    %v1905 = vpop.f32.mrf.mxu0
    %v1906 = vadd.f32 0.0, %v1905
    %1907 = vmatmul.bf16.gmra.mxu0 %v1700
    %v1908 = vpop.f32.mrf.mxu0
    %v1909 = vadd.f32 0.0, %v1908
    %v1910 = vpop.f32.mrf.mxu0
    %v1911 = vadd.f32 0.0, %v1910
    %1912 = vmatmul.bf16.gmra.mxu0 %v1702
    %v1913 = vpop.f32.mrf.mxu0
    %v1914 = vadd.f32 0.0, %v1913
    %v1915 = vpop.f32.mrf.mxu0
    %v1916 = vadd.f32 0.0, %v1915
    %1917 = vmatmul.bf16.gmra.mxu0 %v1704
    %v1918 = vpop.f32.mrf.mxu0
    %v1919 = vadd.f32 0.0, %v1918
    %v1920 = vpop.f32.mrf.mxu0
    %v1921 = vadd.f32 0.0, %v1920
    %1922 = vdwg.mxu0
    %1923 = vmatpush.bf16.msra.mxu0 %v1817
    %1924 = vmatpush.bf16.msra.mxu0 %v1816
    %1925 = vmatpush.bf16.msra.mxu0 %v1815
    %1926 = vmatpush.bf16.msra.mxu0 %v1814
    %1927 = vmatpush.bf16.msra.mxu0 %v1813
    %1928 = vmatpush.bf16.msra.mxu0 %v1812
    %1929 = vmatpush.bf16.msra.mxu0 %v1811
    %1930 = vmatpush.bf16.msra.mxu0 %v1810
    %1931 = vmatmul.bf16.gmra.mxu0 %v1675
    %v1932 = vpop.f32.mrf.mxu0
    %v1933 = vadd.f32 %v1844, %v1932
    %v1934 = vpop.f32.mrf.mxu0
    %v1935 = vadd.f32 %v1846, %v1934
    %1936 = vmatmul.bf16.gmra.mxu0 %v1677
    %v1937 = vpop.f32.mrf.mxu0
    %v1938 = vadd.f32 %v1849, %v1937
    %v1939 = vpop.f32.mrf.mxu0
    %v1940 = vadd.f32 %v1851, %v1939
    %1941 = vmatmul.bf16.gmra.mxu0 %v1679
    %v1942 = vpop.f32.mrf.mxu0
    %v1943 = vadd.f32 %v1854, %v1942
    %v1944 = vpop.f32.mrf.mxu0
    %v1945 = vadd.f32 %v1856, %v1944
    %1946 = vmatmul.bf16.gmra.mxu0 %v1681
    %v1947 = vpop.f32.mrf.mxu0
    %v1948 = vadd.f32 %v1859, %v1947
    %v1949 = vpop.f32.mrf.mxu0
    %v1950 = vadd.f32 %v1861, %v1949
    %1951 = vmatmul.bf16.gmra.mxu0 %v1683
    %v1952 = vpop.f32.mrf.mxu0
    %v1953 = vadd.f32 %v1864, %v1952
    %v1954 = vpop.f32.mrf.mxu0
    %v1955 = vadd.f32 %v1866, %v1954
    %1956 = vmatmul.bf16.gmra.mxu0 %v1685
    %v1957 = vpop.f32.mrf.mxu0
    %v1958 = vadd.f32 %v1869, %v1957
    %v1959 = vpop.f32.mrf.mxu0
    %v1960 = vadd.f32 %v1871, %v1959
    %1961 = vmatmul.bf16.gmra.mxu0 %v1687
    %v1962 = vpop.f32.mrf.mxu0
    %v1963 = vadd.f32 %v1874, %v1962
    %v1964 = vpop.f32.mrf.mxu0
    %v1965 = vadd.f32 %v1876, %v1964
    %1966 = vmatmul.bf16.gmra.mxu0 %v1689
    %v1967 = vpop.f32.mrf.mxu0
    %v1968 = vadd.f32 %v1879, %v1967
    %v1969 = vpop.f32.mrf.mxu0
    %v1970 = vadd.f32 %v1881, %v1969
    %1971 = vmatmul.bf16.gmra.mxu0 %v1691
    %v1972 = vpop.f32.mrf.mxu0
    %v1973 = vadd.f32 %v1884, %v1972
    %v1974 = vpop.f32.mrf.mxu0
    %v1975 = vadd.f32 %v1886, %v1974
    %1976 = vmatmul.bf16.gmra.mxu0 %v1693
    %v1977 = vpop.f32.mrf.mxu0
    %v1978 = vadd.f32 %v1889, %v1977
    %v1979 = vpop.f32.mrf.mxu0
    %v1980 = vadd.f32 %v1891, %v1979
    %1981 = vmatmul.bf16.gmra.mxu0 %v1695
    %v1982 = vpop.f32.mrf.mxu0
    %v1983 = vadd.f32 %v1894, %v1982
    %v1984 = vpop.f32.mrf.mxu0
    %v1985 = vadd.f32 %v1896, %v1984
    %1986 = vmatmul.bf16.gmra.mxu0 %v1697
    %v1987 = vpop.f32.mrf.mxu0
    %v1988 = vadd.f32 %v1899, %v1987
    %v1989 = vpop.f32.mrf.mxu0
    %v1990 = vadd.f32 %v1901, %v1989
    %1991 = vmatmul.bf16.gmra.mxu0 %v1699
    %v1992 = vpop.f32.mrf.mxu0
    %v1993 = vadd.f32 %v1904, %v1992
    %v1994 = vpop.f32.mrf.mxu0
    %v1995 = vadd.f32 %v1906, %v1994
    %1996 = vmatmul.bf16.gmra.mxu0 %v1701
    %v1997 = vpop.f32.mrf.mxu0
    %v1998 = vadd.f32 %v1909, %v1997
    %v1999 = vpop.f32.mrf.mxu0
    %v2000 = vadd.f32 %v1911, %v1999
    %2001 = vmatmul.bf16.gmra.mxu0 %v1703
    %v2002 = vpop.f32.mrf.mxu0
    %v2003 = vadd.f32 %v1914, %v2002
    %v2004 = vpop.f32.mrf.mxu0
    %v2005 = vadd.f32 %v1916, %v2004
    %2006 = vmatmul.bf16.gmra.mxu0 %v1705
    %v2007 = vpop.f32.mrf.mxu0
    %v2008 = vadd.f32 %v1919, %v2007
    %v2009 = vpop.f32.mrf.mxu0
    %v2010 = vadd.f32 %v1921, %v2009
    %2011 = vdwg.mxu0
    %v2012 = vld [vmem:[#allocation7] sm:$0xff]
    %v2013 = vld [vmem:[#allocation7 + $0x8] sm:$0xff]
    %v2014 = vadd.f32 %v1933, %v2012
    %v2015 = vadd.f32 %v1935, %v2013
    %v2016 = vadd.f32 %v1938, %v2012
    %v2017 = vadd.f32 %v1940, %v2013
    %v2018 = vadd.f32 %v1943, %v2012
    %v2019 = vadd.f32 %v1945, %v2013
    %v2020 = vadd.f32 %v1948, %v2012
    %v2021 = vadd.f32 %v1950, %v2013
    %v2022 = vadd.f32 %v1953, %v2012
    %v2023 = vadd.f32 %v1955, %v2013
    %v2024 = vadd.f32 %v1958, %v2012
    %v2025 = vadd.f32 %v1960, %v2013
    %v2026 = vadd.f32 %v1963, %v2012
    %v2027 = vadd.f32 %v1965, %v2013
    %v2028 = vadd.f32 %v1968, %v2012
    %v2029 = vadd.f32 %v1970, %v2013
    %v2030 = vadd.f32 %v1973, %v2012
    %v2031 = vadd.f32 %v1975, %v2013
    %v2032 = vadd.f32 %v1978, %v2012
    %v2033 = vadd.f32 %v1980, %v2013
    %v2034 = vadd.f32 %v1983, %v2012
    %v2035 = vadd.f32 %v1985, %v2013
    %v2036 = vadd.f32 %v1988, %v2012
    %v2037 = vadd.f32 %v1990, %v2013
    %v2038 = vadd.f32 %v1993, %v2012
    %v2039 = vadd.f32 %v1995, %v2013
    %v2040 = vadd.f32 %v1998, %v2012
    %v2041 = vadd.f32 %v2000, %v2013
    %v2042 = vadd.f32 %v2003, %v2012
    %v2043 = vadd.f32 %v2005, %v2013
    %v2044 = vadd.f32 %v2008, %v2012
    %v2045 = vadd.f32 %v2010, %v2013
    %v2046 = vmax.f32 %v2014, %v2015
    %v2047 = vrot.slane %v2046, 4
    %v2048 = vmax.f32 %v2046, %v2047
    %v2049 = vrot.slane %v2048, 2
    %v2050 = vmax.f32 %v2048, %v2049
    %v2051 = vrot.slane %v2050, 1
    %v2052 = vmax.f32 %v2050, %v2051
    %v2053 = vmax.f32 %v2016, %v2017
    %v2054 = vrot.slane %v2053, 4
    %v2055 = vmax.f32 %v2053, %v2054
    %v2056 = vrot.slane %v2055, 2
    %v2057 = vmax.f32 %v2055, %v2056
    %v2058 = vrot.slane %v2057, 1
    %v2059 = vmax.f32 %v2057, %v2058
    %v2060 = vmax.f32 %v2018, %v2019
    %v2061 = vrot.slane %v2060, 4
    %v2062 = vmax.f32 %v2060, %v2061
    %v2063 = vrot.slane %v2062, 2
    %v2064 = vmax.f32 %v2062, %v2063
    %v2065 = vrot.slane %v2064, 1
    %v2066 = vmax.f32 %v2064, %v2065
    %v2067 = vmax.f32 %v2020, %v2021
    %v2068 = vrot.slane %v2067, 4
    %v2069 = vmax.f32 %v2067, %v2068
    %v2070 = vrot.slane %v2069, 2
    %v2071 = vmax.f32 %v2069, %v2070
    %v2072 = vrot.slane %v2071, 1
    %v2073 = vmax.f32 %v2071, %v2072
    %v2074 = vmax.f32 %v2022, %v2023
    %v2075 = vrot.slane %v2074, 4
    %v2076 = vmax.f32 %v2074, %v2075
    %v2077 = vrot.slane %v2076, 2
    %v2078 = vmax.f32 %v2076, %v2077
    %v2079 = vrot.slane %v2078, 1
    %v2080 = vmax.f32 %v2078, %v2079
    %v2081 = vmax.f32 %v2024, %v2025
    %v2082 = vrot.slane %v2081, 4
    %v2083 = vmax.f32 %v2081, %v2082
    %v2084 = vrot.slane %v2083, 2
    %v2085 = vmax.f32 %v2083, %v2084
    %v2086 = vrot.slane %v2085, 1
    %v2087 = vmax.f32 %v2085, %v2086
    %v2088 = vmax.f32 %v2026, %v2027
    %v2089 = vrot.slane %v2088, 4
    %v2090 = vmax.f32 %v2088, %v2089
    %v2091 = vrot.slane %v2090, 2
    %v2092 = vmax.f32 %v2090, %v2091
    %v2093 = vrot.slane %v2092, 1
    %v2094 = vmax.f32 %v2092, %v2093
    %v2095 = vmax.f32 %v2028, %v2029
    %v2096 = vrot.slane %v2095, 4
    %v2097 = vmax.f32 %v2095, %v2096
    %v2098 = vrot.slane %v2097, 2
    %v2099 = vmax.f32 %v2097, %v2098
    %v2100 = vrot.slane %v2099, 1
    %v2101 = vmax.f32 %v2099, %v2100
    %v2102 = vmax.f32 %v2030, %v2031
    %v2103 = vrot.slane %v2102, 4
    %v2104 = vmax.f32 %v2102, %v2103
    %v2105 = vrot.slane %v2104, 2
    %v2106 = vmax.f32 %v2104, %v2105
    %v2107 = vrot.slane %v2106, 1
    %v2108 = vmax.f32 %v2106, %v2107
    %v2109 = vmax.f32 %v2032, %v2033
    %v2110 = vrot.slane %v2109, 4
    %v2111 = vmax.f32 %v2109, %v2110
    %v2112 = vrot.slane %v2111, 2
    %v2113 = vmax.f32 %v2111, %v2112
    %v2114 = vrot.slane %v2113, 1
    %v2115 = vmax.f32 %v2113, %v2114
    %v2116 = vmax.f32 %v2034, %v2035
    %v2117 = vrot.slane %v2116, 4
    %v2118 = vmax.f32 %v2116, %v2117
    %v2119 = vrot.slane %v2118, 2
    %v2120 = vmax.f32 %v2118, %v2119
    %v2121 = vrot.slane %v2120, 1
    %v2122 = vmax.f32 %v2120, %v2121
    %v2123 = vmax.f32 %v2036, %v2037
    %v2124 = vrot.slane %v2123, 4
    %v2125 = vmax.f32 %v2123, %v2124
    %v2126 = vrot.slane %v2125, 2
    %v2127 = vmax.f32 %v2125, %v2126
    %v2128 = vrot.slane %v2127, 1
    %v2129 = vmax.f32 %v2127, %v2128
    %v2130 = vmax.f32 %v2038, %v2039
    %v2131 = vrot.slane %v2130, 4
    %v2132 = vmax.f32 %v2130, %v2131
    %v2133 = vrot.slane %v2132, 2
    %v2134 = vmax.f32 %v2132, %v2133
    %v2135 = vrot.slane %v2134, 1
    %v2136 = vmax.f32 %v2134, %v2135
    %v2137 = vmax.f32 %v2040, %v2041
    %v2138 = vrot.slane %v2137, 4
    %v2139 = vmax.f32 %v2137, %v2138
    %v2140 = vrot.slane %v2139, 2
    %v2141 = vmax.f32 %v2139, %v2140
    %v2142 = vrot.slane %v2141, 1
    %v2143 = vmax.f32 %v2141, %v2142
    %v2144 = vmax.f32 %v2042, %v2043
    %v2145 = vrot.slane %v2144, 4
    %v2146 = vmax.f32 %v2144, %v2145
    %v2147 = vrot.slane %v2146, 2
    %v2148 = vmax.f32 %v2146, %v2147
    %v2149 = vrot.slane %v2148, 1
    %v2150 = vmax.f32 %v2148, %v2149
    %v2151 = vmax.f32 %v2044, %v2045
    %v2152 = vrot.slane %v2151, 4
    %v2153 = vmax.f32 %v2151, %v2152
    %v2154 = vrot.slane %v2153, 2
    %v2155 = vmax.f32 %v2153, %v2154
    %v2156 = vrot.slane %v2155, 1
    %v2157 = vmax.f32 %v2155, %v2156
    %v2158 = vmax.f32 %v2052, 0.0
    %v2159 = vmax.f32 %v2059, 0.0
    %v2160 = vmax.f32 %v2066, 0.0
    %v2161 = vmax.f32 %v2073, 0.0
    %v2162 = vmax.f32 %v2080, 0.0
    %v2163 = vmax.f32 %v2087, 0.0
    %v2164 = vmax.f32 %v2094, 0.0
    %v2165 = vmax.f32 %v2101, 0.0
    %v2166 = vmax.f32 %v2108, 0.0
    %v2167 = vmax.f32 %v2115, 0.0
    %v2168 = vmax.f32 %v2122, 0.0
    %v2169 = vmax.f32 %v2129, 0.0
    %v2170 = vmax.f32 %v2136, 0.0
    %v2171 = vmax.f32 %v2143, 0.0
    %v2172 = vmax.f32 %v2150, 0.0
    %v2173 = vmax.f32 %v2157, 0.0
    %vm2190 = vcmask 1041409
    %v2191 = vsel %vm2190, %v2159, %v2158
    %vm2192 = vcmask 1042434
    %v2193 = vsel %vm2192, %v2160, %v2191
    %vm2194 = vcmask 1043459
    %v2195 = vsel %vm2194, %v2161, %v2193
    %vm2196 = vcmask 1044484
    %v2197 = vsel %vm2196, %v2162, %v2195
    %vm2198 = vcmask 1045509
    %v2199 = vsel %vm2198, %v2163, %v2197
    %vm2200 = vcmask 1046534
    %v2201 = vsel %vm2200, %v2164, %v2199
    %vm2202 = vcmask 1047559
    %v2203 = vsel %vm2202, %v2165, %v2201
    %v2204 = vsel %vm2190, %v2167, %v2166
    %v2205 = vsel %vm2192, %v2168, %v2204
    %v2206 = vsel %vm2194, %v2169, %v2205
    %v2207 = vsel %vm2196, %v2170, %v2206
    %v2208 = vsel %vm2198, %v2171, %v2207
    %v2209 = vsel %vm2200, %v2172, %v2208
    %v2210 = vsel %vm2202, %v2173, %v2209
    %2213 = vst [vmem:[#allocation8] sm:$0xff] %v2203
    %2214 = vst [vmem:[#allocation8 + $0x8] sm:$0xff] %v2210
    // Predicated region
    $region26: #{tpu_custom_call.1} parent=1 // pred_check
      _
    $region27: #{tpu_custom_call.1} parent=1 // pred_check_branch
      %2216 = sbr.rel (0) target = $region29
    $region28: #{tpu_custom_call.1} parent=1 // pred_region
      %2218 = vsyncadd [#allocation4], 0
      %s2219 = sshll.u32 [#allocation8], 4
      %s2220 = int_to_ptr.vmem [resolvable:$true] %s2219
      %s2221 = sshll.u32 %s3, 4
      %s2222 = int_to_ptr.hbm [resolvable:$true] %s2221
      %2227 = dma.vmem_to_hbm [thread:$0]  %s2220, 256, %s2222, [#allocation4], 128, 128, 8
    $region29: #{tpu_custom_call.1} parent=1 // pred_fallthru
      _
    // Predicated region
    $region30: #{tpu_custom_call.1} parent=1 // pred_check
      _
    $region31: #{tpu_custom_call.1} parent=1 // pred_check_branch
      %2229 = sbr.rel (0) target = $region33
    $region32: #{tpu_custom_call.1} parent=1 // pred_region
      %2231 = dma.done [#allocation4], 256
    $region33: #{tpu_custom_call.1} parent=1 // pred_fallthru
      _
    %2232 = vsyncpa [#allocation3], 1
    %2233 = vsyncpa [#allocation6], 1
    %2234 = vsyncpa [#allocation4], 1

</llo_original>
